<compile_context>
chip_gen: v7x
topology: tpu7x:2x2x1
jax: 0.10.0
libtpu: 0.0.40
codegen_flags: <defaults>
</compile_context>

<pallas_src>
import jax
import jax.numpy as jnp
from jax import lax
from jax.experimental import pallas as pl
from jax.experimental.pallas import tpu as pltpu


def _linear_embed_kernel(x_ref, w_ref, b_ref, o_ref):
    # x_ref: (K, TN) native-layout tile   w_ref: (K, E)   b_ref: (1, E)
    # o_ref: (TN, E)
    # Contract K (dim 0 of both operands) -> (TN, E); accumulate in f32, add
    # bias in f32, cast on the final store.  K is tiny, so MXU/VPU cost is
    # negligible; any relayout Mosaic inserts for the transposed LHS lands in
    # the otherwise-idle XLU slot and overlaps the tile DMA.
    y = lax.dot_general(
        x_ref[...], w_ref[...],
        dimension_numbers=(((0,), (0,)), ((), ())),
        preferred_element_type=jnp.float32,
    )
    o_ref[...] = (y + b_ref[...]).astype(o_ref.dtype)


def linear_graph_embedding(x, weight, bias, *, tn=None):
    """x: (B, input_size, N)  weight: (E, input_size)  bias: (E,)
    returns (B, N, E), matching the PyTorch module's output."""
    B, K, N = x.shape
    E = weight.shape[0]
    elt = x.dtype.itemsize

    # Small-shape guard: when total work is tiny (or N is below one lane
    # tile), launch/grid overhead dominates any kernel win -- let XLA fuse it.
    if N < 128 or B * N * (K + E) * elt < (256 << 10):
        y = jnp.einsum("bkn,ek->bne", x, weight,
                       preferred_element_type=jnp.float32)
        return (y + bias).astype(x.dtype)

    # Tiny one-time parameter reshapes only (x is never transposed in HBM).
    w_t = jnp.transpose(weight, (1, 0))   # (K, E)
    b2d = bias.reshape(1, E)              # (1, E)

    # --- Node (row) tile selection ------------------------------------------
    # Bytes moved per grid step ~= (K + E) * elt * TN.  Target ~1 MiB/step so
    # the ~0.35 us fixed per-step cost is <10% of the HBM time on every
    # generation (v5e 0.82 TB/s ... v7x 3.2 TB/s), capped at 8192 rows.
    if tn is None:
        target_step_bytes = 1 << 20
        tn = target_step_bytes // ((K + E) * elt)
        tn = max(128, min(8192, (tn // 128) * 128))
        # Never tile wider than the lane-rounded node count (block_shape only
        # needs 128-divisibility; Pallas pads/clips the ragged last block).
        n_rounded = -(-N // 128) * 128
        tn = min(tn, n_rounded)
        # Keep enough total grid steps that both v7x TensorCores get work and
        # each still pipelines (read of step i+1 overlaps writeback of i),
        # but never shrink below 512 rows per step.
        while B * pl.cdiv(N, tn) < 8 and tn > 512:
            tn = max(512, ((tn // 2) // 128) * 128)
    else:
        tn = max(128, (int(tn) // 128) * 128)

    n_tiles = pl.cdiv(N, tn)

    # --- VMEM budget ----------------------------------------------------------
    # Account for layout padding: K pads to a multiple of 8 sublanes and the
    # (TN, E) output/accumulator tiles pad to 128 lanes (4x for E=32).
    k_pad = -(-K // 8) * 8
    e_pad = -(-E // 128) * 128
    blk_bytes = (2 * k_pad * tn * elt            # double-buffered x tiles
                 + 2 * tn * e_pad * max(elt, 4)  # double-buffered out/f32 acc tiles
                 + k_pad * e_pad * elt           # resident weight
                 + e_pad * 4)                    # resident bias row
    try:
        vmem_cap = int(pltpu.get_tpu_info().vmem_capacity_bytes)
    except Exception:
        vmem_cap = 64 << 20                      # conservative (v7x per-TC)
    vmem_limit = int(min(max(2 * blk_bytes, 16 << 20), (vmem_cap * 3) // 4))

    # NOTE: weight/bias have constant index_maps, so the pipeline fetches them
    # once and keeps them resident; explicit single-buffering would only save
    # a few KiB, so it is not requested.
    # TODO(synk): for E < 128 a lane-dense (rows/G, G*E) output packing would
    # remove the 75%-masked partial stores, but the required in-kernel
    # lane-strided relayout does not lower reliably, so the output stays (TN, E).
    return pl.pallas_call(
        _linear_embed_kernel,
        out_shape=jax.ShapeDtypeStruct((B, N, E), x.dtype),
        grid=(B, n_tiles),
        in_specs=[
            pl.BlockSpec((None, K, tn), lambda b, n: (b, 0, n)),   # x tile (native layout)
            pl.BlockSpec((K, E), lambda b, n: (0, 0)),             # weight, VMEM-resident
            pl.BlockSpec((1, E), lambda b, n: (0, 0)),             # bias,   VMEM-resident
        ],
        out_specs=pl.BlockSpec((None, tn, E), lambda b, n: (b, n, 0)),
        compiler_params=pltpu.CompilerParams(
            dimension_semantics=("parallel", "parallel"),
            vmem_limit_bytes=vmem_limit,
        ),
    )(x, w_t, b2d)


if __name__ == "__main__":
    key = jax.random.PRNGKey(0)
    kx, kw, kb = jax.random.split(key, 3)

    # Small shapes consistent with the module: batch=2, input_size=16,
    # N_nodes=8, embedding_size=32 (dispatches to the fused einsum path).
    B, K, N, E = 2, 16, 8, 32
    x = jax.random.normal(kx, (B, K, N), dtype=jnp.float32)

    # Deterministic nn.Linear-style init: U(-1/sqrt(K), 1/sqrt(K)).
    bound = 1.0 / (K ** 0.5)
    weight = jax.random.uniform(kw, (E, K), minval=-bound, maxval=bound,
                                dtype=jnp.float32)
    bias = jax.random.uniform(kb, (E,), minval=-bound, maxval=bound,
                              dtype=jnp.float32)

    out = jax.block_until_ready(linear_graph_embedding(x, weight, bias))
    # Reference: out[b, n, e] = sum_k x[b, k, n] * W[e, k] + bias[e]
    ref = jnp.einsum("bkn,ek->bne", x, weight) + bias
    assert out.shape == (B, N, E)
    assert jnp.allclose(out, ref, atol=1e-5, rtol=1e-5)

    # Medium case exercising the Pallas path with a ragged last node tile
    # (N2=640 is not a multiple of the chosen tile) and a >1 batch grid axis.
    B2, N2 = 3, 640
    x2 = jax.random.normal(kx, (B2, K, N2), dtype=jnp.float32)
    out2 = jax.block_until_ready(linear_graph_embedding(x2, weight, bias))
    ref2 = jnp.einsum("bkn,ek->bne", x2, weight) + bias
    assert out2.shape == (B2, N2, E)
    assert jnp.allclose(out2, ref2, atol=1e-4, rtol=1e-4)

    # Large case exercising the big (multi-thousand-row) node tiles with
    # multiple grid steps per batch plus a ragged final block.
    B3, N3 = 2, 8192
    x3 = jax.random.normal(kx, (B3, K, N3), dtype=jnp.float32)
    out3 = jax.block_until_ready(linear_graph_embedding(x3, weight, bias))
    ref3 = jnp.einsum("bkn,ek->bne", x3, weight) + bias
    assert out3.shape == (B3, N3, E)
    assert jnp.allclose(out3, ref3, atol=1e-4, rtol=1e-4)

    print("KERNEL_OK")
</pallas_src>

<mosaic_0001>
module attributes {stable_mosaic.version = 11 : i64} {
  func.func @_linear_embed_kernel(%arg0: i32, %arg1: i32, %arg2: memref<1x16x512xf32, #tpu.memory_space<vmem>>, %arg3: memref<16x32xf32, #tpu.memory_space<vmem>>, %arg4: memref<1x32xf32, #tpu.memory_space<vmem>>, %arg5: memref<1x512x32xf32, #tpu.memory_space<vmem>>) attributes {dimension_semantics = [#tpu.dimension_semantics<parallel>, #tpu.dimension_semantics<parallel>], iteration_bounds = array<i64: 3, 2>, scalar_prefetch = 0 : i64, scratch_operands = 0 : i64, tpu.core_type = #tpu.core_type<tc>, window_params = [{transform_indices = @transform_0, window_bounds = array<i64: 1, 16, 512>}, {pipeline_mode = #tpu.pipeline_mode<synchronous>, transform_indices = @transform_1, window_bounds = array<i64: 16, 32>}, {pipeline_mode = #tpu.pipeline_mode<synchronous>, transform_indices = @transform_2, window_bounds = array<i64: 1, 32>}, {transform_indices = @transform_3, window_bounds = array<i64: 1, 512, 32>}]} {
    %c0 = arith.constant 0 : index
    %c0_0 = arith.constant 0 : index
    %c0_1 = arith.constant 0 : index
    %0 = vector.load %arg2[%c0, %c0_0, %c0_1] : memref<1x16x512xf32, #tpu.memory_space<vmem>>, vector<1x16x512xf32>
    %1 = vector.shape_cast %0 : vector<1x16x512xf32> to vector<16x512xf32>
    %c0_2 = arith.constant 0 : index
    %c0_3 = arith.constant 0 : index
    %2 = vector.load %arg3[%c0_2, %c0_3] : memref<16x32xf32, #tpu.memory_space<vmem>>, vector<16x32xf32>
    %cst = arith.constant dense<0.000000e+00> : vector<512x32xf32>
    %3 = tpu.matmul %1, %2, %cst {dimension_numbers = #tpu.dot_dimension_numbers<[0], [0], [1], [1], [0, 1, 1, 1], [], []>} : vector<16x512xf32>, vector<16x32xf32>, vector<512x32xf32> -> vector<512x32xf32>
    %c0_4 = arith.constant 0 : index
    %c0_5 = arith.constant 0 : index
    %4 = vector.load %arg4[%c0_4, %c0_5] : memref<1x32xf32, #tpu.memory_space<vmem>>, vector<1x32xf32>
    %5 = vector.broadcast %4 : vector<1x32xf32> to vector<512x32xf32>
    %6 = arith.addf %3, %5 : vector<512x32xf32>
    %c0_6 = arith.constant 0 : index
    %c0_7 = arith.constant 0 : index
    %c0_8 = arith.constant 0 : index
    %7 = vector.load %arg5[%c0_6, %c0_7, %c0_8] : memref<1x512x32xf32, #tpu.memory_space<vmem>>, vector<1x512x32xf32>
    %8 = vector.shape_cast %7 : vector<1x512x32xf32> to vector<512x32xf32>
    %9 = vector.shape_cast %6 : vector<512x32xf32> to vector<1x512x32xf32>
    tpu.vector_store %arg5[%c0_6, %c0_7, %c0_8], %9 {strides = array<i32>} : memref<1x512x32xf32, #tpu.memory_space<vmem>>, vector<1x512x32xf32>,
    return
  }
  func.func @transform_0(%arg0: i32, %arg1: i32) -> (i32, i32, i32) {
    %c0_i32 = arith.constant 0 : i32
    %c0_i32_0 = arith.constant 0 : i32
    return %arg0, %c0_i32, %arg1 : i32, i32, i32
  }
  func.func @transform_1(%arg0: i32, %arg1: i32) -> (i32, i32) {
    %c0_i32 = arith.constant 0 : i32
    %c0_i32_0 = arith.constant 0 : i32
    %c0_i32_1 = arith.constant 0 : i32
    return %c0_i32, %c0_i32_0 : i32, i32
  }
  func.func @transform_2(%arg0: i32, %arg1: i32) -> (i32, i32) {
    %c0_i32 = arith.constant 0 : i32
    %c0_i32_0 = arith.constant 0 : i32
    %c0_i32_1 = arith.constant 0 : i32
    return %c0_i32, %c0_i32_0 : i32, i32
  }
  func.func @transform_3(%arg0: i32, %arg1: i32) -> (i32, i32, i32) {
    %c0_i32 = arith.constant 0 : i32
    %c0_i32_0 = arith.constant 0 : i32
    return %arg0, %arg1, %c0_i32 : i32, i32, i32
  }
}

</mosaic_0001>

<llo_original>
// kernel: tpu_custom_call.1
$region0: #{tpu_custom_call.1}
  #allocation0 [shape = 'u32[]', space=smem, size = 0x4, offset = 0x4, fixed_abs, tag = 'smem constant byte address 0x4 - core index']
  #allocation1 [shape = 'u32[144,128]{1,0:T(1,128)}', space=vmem, size = 0x12000, scoped, tag = 'internal scratch']
  %s0 = inlined_call_operand.hbm [shape: f32[3,16,640], index: 0, kind: input, shape index: {}]
  %s1 = inlined_call_operand.hbm [shape: f32[16,32], index: 1, kind: input, shape index: {}]
  %s2 = inlined_call_operand.vmem [shape: f32[1,32], index: 2, kind: input, shape index: {}]
  %s3 = inlined_call_operand.vmem [shape: f32[3,640,32], index: 3, kind: output, shape index: {}]
  %s4 = sld [smem:[#allocation0]]
  $region101: #{tpu_custom_call.1} parent=0
    _
  %s6 = ssub.s32 1, %s4
  %s7 = scalar_select 0, %s6, %s4
  $region1: #{tpu_custom_call.1} parent=0
    #allocation2 [shape = 'u8[65536]{0}', space=vmem, size = 0x10000, scoped, tag = 'input window, operand 0']
    #allocation3 [shape = 's32[2]{0}', space=sflag, size = 0x8, scoped, tag = 'scoped memory for tpu_custom_call.1']
    #allocation4 [shape = 'u8[8192]{0}', space=vmem, size = 0x2000, scoped, tag = 'input window, operand 1, single buffered']
    #allocation5 [shape = 's32[1]{0}', space=sflag, size = 0x4, scoped, tag = 'scoped memory for tpu_custom_call.1']
    #allocation6 [shape = 'u8[524288]{0}', space=vmem, size = 0x80000, scoped, tag = 'output window, operand 0']
    %8 = vsyncpa [#allocation3], 0
    %s9 = scalar_lea.sflag [#allocation3], 1
    %10 = vsyncpa %s9, 0
    %11 = vsyncpa [#allocation5], 0
    loop: start=0, step=1, limit=8
    $region2: #{tpu_custom_call.1} parent=1 // loop_pre_header
      _
    $region3: #{tpu_custom_call.1} parent=1 // loop_header
      %s13 = sphi 0, %s17
      %p14 = scmp.ge.s32.totalorder %s13, 8
      %s20 = sphi 0, %s32
      %s21 = sphi 0, %s28
      %s22 = sphi 0, %s20
      %s23 = sphi 0, %s21
      %s24 = sphi 0, %s22
      %s25 = sphi 0, %s23
      %s37 = sphi 0, %s39
      %s40 = sphi 0, %s37
      %s41 = sphi 0, %s40
      %s57 = sphi 0, %s41
      %s61 = sphi 0, %s61
      %s63 = sphi 0, %s61
      %s64 = sphi 0, %s63
      %s78 = sphi 0, %s64
      %s82 = sphi 0, %s82
      %s84 = sphi 0, %s82
      %s85 = sphi 0, %s84
      %s99 = sphi 0, %s85
      %s107 = sphi 0, %s109
      %s110 = sphi 0, %s107
      %s111 = sphi 0, %s110
      %s127 = sphi 0, %s111
    $region4: #{tpu_custom_call.1} parent=1 // loop_header_branch
      %16 = sbr.rel (%p14) target = $region8
    $region5: #{tpu_custom_call.1} parent=1 // loop_body
      %s18 = ssub.s32 %s13, 1
      %s19 = ssub.s32 %s13, 2
      %s26 = sadd.s32 1, %s21
      %p27 = scmp.ge.s32.totalorder %s26, 2
      %s28 = scalar_select %p27, 0, %s26
      %s29 = sadd.s32 1, %s20
      %s30 = scalar_select %p27, %s29, %s20
      %p31 = scmp.ge.s32.totalorder %s30, 3
      %s32 = scalar_select %p31, 0, %s30
      %s33 = ssub.s32 %s20, %s32
      %s34 = ssub.s32 %s21, %s28
      %s35 = sor.u32 %s33, %s34
      %p36 = scmp.eq.s32.totalorder %s35, 0
      %s38 = sadd.s32 %s37, 1
      %s39 = scalar_select %p36, %s37, %s38
      %p42 = pneg %p36
      %p43 = scmp.eq.s32.totalorder %s13, 5
      %p44 = por %p42, %p43
      %p45 = scmp.ne.s32.totalorder %s37, %s40
      %p46 = scmp.eq.s32.totalorder %s13, 0
      %p47 = por %p45, %p46
      %p48 = scmp.ne.s32.totalorder %s37, %s40
      %p49 = scmp.eq.s32.totalorder %s18, 5
      %p50 = por %p48, %p49
      %p51 = scmp.ne.s32.totalorder %s40, %s41
      %p52 = scmp.eq.s32.totalorder %s18, 0
      %p53 = por %p51, %p52
      %p54 = scmp.ne.s32.totalorder %s40, %s41
      %p55 = scmp.eq.s32.totalorder %s19, 5
      %p56 = por %p54, %p55
      %p58 = scmp.ne.s32.totalorder %s41, %s57
      %p59 = scmp.eq.s32.totalorder %s19, 0
      %p60 = por %p58, %p59
      %s62 = sadd.s32 %s61, 1
      %p65 = scmp.eq.s32.totalorder %s13, 5
      %p66 = scmp.ne.s32.totalorder %s61, %s63
      %p67 = scmp.eq.s32.totalorder %s13, 0
      %p68 = por %p66, %p67
      %p69 = scmp.ne.s32.totalorder %s61, %s63
      %p70 = scmp.eq.s32.totalorder %s18, 5
      %p71 = por %p69, %p70
      %p72 = scmp.ne.s32.totalorder %s63, %s64
      %p73 = scmp.eq.s32.totalorder %s18, 0
      %p74 = por %p72, %p73
      %p75 = scmp.ne.s32.totalorder %s63, %s64
      %p76 = scmp.eq.s32.totalorder %s19, 5
      %p77 = por %p75, %p76
      %p79 = scmp.ne.s32.totalorder %s64, %s78
      %p80 = scmp.eq.s32.totalorder %s19, 0
      %p81 = por %p79, %p80
      %s83 = sadd.s32 %s82, 1
      %p86 = scmp.eq.s32.totalorder %s13, 5
      %p87 = scmp.ne.s32.totalorder %s82, %s84
      %p88 = scmp.eq.s32.totalorder %s13, 0
      %p89 = por %p87, %p88
      %p90 = scmp.ne.s32.totalorder %s82, %s84
      %p91 = scmp.eq.s32.totalorder %s18, 5
      %p92 = por %p90, %p91
      %p93 = scmp.ne.s32.totalorder %s84, %s85
      %p94 = scmp.eq.s32.totalorder %s18, 0
      %p95 = por %p93, %p94
      %p96 = scmp.ne.s32.totalorder %s84, %s85
      %p97 = scmp.eq.s32.totalorder %s19, 5
      %p98 = por %p96, %p97
      %p100 = scmp.ne.s32.totalorder %s85, %s99
      %p101 = scmp.eq.s32.totalorder %s19, 0
      %p102 = por %p100, %p101
      %s103 = ssub.s32 %s20, %s32
      %s104 = ssub.s32 %s21, %s28
      %s105 = sor.u32 %s103, %s104
      %p106 = scmp.eq.s32.totalorder %s105, 0
      %s108 = sadd.s32 %s107, 1
      %s109 = scalar_select %p106, %s107, %s108
      %p112 = pneg %p106
      %p113 = scmp.eq.s32.totalorder %s13, 5
      %p114 = por %p112, %p113
      %p115 = scmp.ne.s32.totalorder %s107, %s110
      %p116 = scmp.eq.s32.totalorder %s13, 0
      %p117 = por %p115, %p116
      %p118 = scmp.ne.s32.totalorder %s107, %s110
      %p119 = scmp.eq.s32.totalorder %s18, 5
      %p120 = por %p118, %p119
      %p121 = scmp.ne.s32.totalorder %s110, %s111
      %p122 = scmp.eq.s32.totalorder %s18, 0
      %p123 = por %p121, %p122
      %p124 = scmp.ne.s32.totalorder %s110, %s111
      %p125 = scmp.eq.s32.totalorder %s19, 5
      %p126 = por %p124, %p125
      %p128 = scmp.ne.s32.totalorder %s111, %s127
      %p129 = scmp.eq.s32.totalorder %s19, 0
      %p130 = por %p128, %p129
      %p131 = scmp.le.s32.totalorder 1, %s13
      %p132 = scmp.lt.s32.totalorder %s13, 7
      %p133 = pnand %p131, %p132
      %p134 = pneg %p133
      // Predicated region
      $region9: #{tpu_custom_call.1} parent=5 // pred_check
        _
      $region10: #{tpu_custom_call.1} parent=5 // pred_check_branch
        %136 = sbr.rel (%p133) target = $region12
      $region11: #{tpu_custom_call.1} parent=5 // pred_region
        %s137 = ssub.s32 %s13, 1
        // Predicated region
        $region13: #{tpu_custom_call.1} parent=11 // pred_check
          %p138 = pneg %p74
        $region14: #{tpu_custom_call.1} parent=11 // pred_check_branch
          %140 = sbr.rel (%p138) target = $region16
        $region15: #{tpu_custom_call.1} parent=11 // pred_region
          %s142 = ssub.s32 256, 256
          %143 = vsyncadd [#allocation5], %s142
          %s144 = sshll.u32 [#allocation4], 4
          %s145 = int_to_ptr.vmem [resolvable:$true] %s144
          %150 = dma.hbm_to_vmem [thread:$0]  %s1, 256, %s145, [#allocation5], 128, 128, 8
        $region16: #{tpu_custom_call.1} parent=11 // pred_fallthru
          _
        // Predicated region
        $region17: #{tpu_custom_call.1} parent=11 // pred_check
          %p151 = pneg %p95
        $region18: #{tpu_custom_call.1} parent=11 // pred_check_branch
          %153 = sbr.rel (%p151) target = $region20
        $region19: #{tpu_custom_call.1} parent=11 // pred_region
          _
        $region20: #{tpu_custom_call.1} parent=11 // pred_fallthru
          _
      $region12: #{tpu_custom_call.1} parent=5 // pred_fallthru
        _
      %p154 = scmp.lt.s32.totalorder %s13, 6
      // Predicated region
      $region21: #{tpu_custom_call.1} parent=5 // pred_check
        %p155 = pneg %p154
      $region22: #{tpu_custom_call.1} parent=5 // pred_check_branch
        %157 = sbr.rel (%p155) target = $region24
      $region23: #{tpu_custom_call.1} parent=5 // pred_region
        // Predicated region
        $region25: #{tpu_custom_call.1} parent=23 // pred_check
          %p158 = pneg %p47
        $region26: #{tpu_custom_call.1} parent=23 // pred_check_branch
          %160 = sbr.rel (%p158) target = $region28
        $region27: #{tpu_custom_call.1} parent=23 // pred_region
          %s161 = sand.u32 %s37, 1
          %s162 = scalar_lea.sflag [#allocation3], %s161
          %s163 = sand.u32 %s37, 1
          %s164 = smul.addr %s163, 64
          %s165 = scalar_lea.vmem [#allocation2], %s164
          %s166 = smul.u32 4, %s21
          %s167 = ssub.s32 5, %s166
          %p168 = scmp.lt.s32.totalorder %s167, 4
          %s169 = scalar_select %p168, %s167, 4
          %s170 = smul.u32 256, %s169
          %s172 = ssub.s32 1024, %s170
          %173 = vsyncadd %s162, %s172
          %p174 = scmp.ne.s32.totalorder 0, %s170
          %s175 = smul.addr %s20, 10
          %s176 = sadd.s32 %s166, %s175
          %s177 = smul.addr %s176, 128
          %s178 = scalar_lea.hbm %s0, %s177
          %s179 = smul.u32 %s169, 8
          %s180 = smul.u32 %s179, 2
          %s181 = sshll.u32 %s165, 4
          %s182 = int_to_ptr.vmem [resolvable:$true] %s181
          %s183 = sshll.u32 %s180, 4
          %187 = dma.hbm_to_vmem [thread:$0]  (%p174), %s178, %s183, %s182, %s162, 640, 512, %s179
        $region28: #{tpu_custom_call.1} parent=23 // pred_fallthru
          _
      $region24: #{tpu_custom_call.1} parent=5 // pred_fallthru
        _
      %p188 = scmp.le.s32.totalorder 1, %s13
      %p189 = scmp.lt.s32.totalorder %s13, 7
      %p190 = pnand %p188, %p189
      %p191 = pneg %p190
      // Predicated region
      $region29: #{tpu_custom_call.1} parent=5 // pred_check
        _
      $region30: #{tpu_custom_call.1} parent=5 // pred_check_branch
        %193 = sbr.rel (%p190) target = $region32
      $region31: #{tpu_custom_call.1} parent=5 // pred_region
        %s194 = ssub.s32 %s13, 1
        %s195 = sand.u32 %s40, 1
        %s196 = scalar_lea.sflag [#allocation3], %s195
        %s197 = sand.u32 %s40, 1
        %s198 = smul.addr %s197, 64
        %s199 = scalar_lea.vmem [#allocation2], %s198
        // Predicated region
        $region33: #{tpu_custom_call.1} parent=31 // pred_check
          %p200 = pneg %p53
        $region34: #{tpu_custom_call.1} parent=31 // pred_check_branch
          %202 = sbr.rel (%p200) target = $region36
        $region35: #{tpu_custom_call.1} parent=31 // pred_region
          %203 = dma.done %s196, 1024
        $region36: #{tpu_custom_call.1} parent=31 // pred_fallthru
          _
        // Predicated region
        $region37: #{tpu_custom_call.1} parent=31 // pred_check
          %p204 = pneg %p74
        $region38: #{tpu_custom_call.1} parent=31 // pred_check_branch
          %206 = sbr.rel (%p204) target = $region40
        $region39: #{tpu_custom_call.1} parent=31 // pred_region
          %207 = dma.done [#allocation5], 256
        $region40: #{tpu_custom_call.1} parent=31 // pred_fallthru
          _
        %s208 = sand.u32 %s40, 1
        %s209 = scalar_lea.sflag [#allocation3], %s208
        %s210 = sand.u32 %s40, 1
        %s211 = smul.addr %s210, 64
        %s212 = scalar_lea.vmem [#allocation2], %s211
        %p213 = pneg %p53
        %p214 = pneg %p50
        %p215 = pneg %p74
        %p216 = pneg %p71
        %p217 = pneg %p95
        %p218 = pneg %p92
        %p219 = pneg %p123
        %p220 = pneg %p120
        %s221 = sand.u32 %s110, 1
        %s222 = sand.u32 %s110, 1
        %s223 = smul.addr %s222, 512
        %s224 = scalar_lea.vmem [#allocation6], %s223
        %s225 = smul.u32 4, %s23
        %s226 = ssub.s32 5, %s225
        %p227 = scmp.lt.s32.totalorder %s226, 4
        %s228 = scalar_select %p227, %s226, 4
        %s229 = smul.u32 256, %s228
        %s230 = smul.u32 64, %s23
        %s231 = ssub.s32 80, %s230
        %p232 = scmp.lt.s32.totalorder %s231, 64
        %s233 = scalar_select %p232, %s231, 64
        %s234 = smul.u32 128, %s233
        %v235 = vld [vmem:[%s199] sm:$0xff]
        %v236 = vld [vmem:[%s199 + $0x8] sm:$0xff]
        %v237 = vld [vmem:[%s199 + $0x10] sm:$0xff]
        %v238 = vld [vmem:[%s199 + $0x18] sm:$0xff]
        %v239 = vld [vmem:[%s199 + $0x20] sm:$0xff]
        %v240 = vld [vmem:[%s199 + $0x28] sm:$0xff]
        %v241 = vld [vmem:[%s199 + $0x30] sm:$0xff]
        %v242 = vld [vmem:[%s199 + $0x38] sm:$0xff]
        %v243 = vld [vmem:[#allocation4] sm:$0xff]
        %v244 = vld [vmem:[#allocation4 + $0x8] sm:$0xff]
        %v245 = vld [vmem:[%s2] sm:$0x1]
        %v247 = vlaneseq
        %v248 = vshrl.u32 %v247, 7
        %v249 = vsub.s32 0, %v248
        %v250 = vrot.slane %v245, %v249
        %252 = vxpose.xlu0.b32.start [1/16] %v235, 128
        %253 = vxpose.xlu0.b32.cont [2/16] %v239, 128
        %254 = vxpose.xlu0.b32.cont [3/16] 0.0, 128
        %255 = vxpose.xlu0.b32.cont [4/16] 0.0, 128
        %256 = vxpose.xlu0.b32.cont [5/16] 0.0, 128
        %257 = vxpose.xlu0.b32.cont [6/16] 0.0, 128
        %258 = vxpose.xlu0.b32.cont [7/16] 0.0, 128
        %259 = vxpose.xlu0.b32.cont [8/16] 0.0, 128
        %260 = vxpose.xlu0.b32.cont [9/16] 0.0, 128
        %261 = vxpose.xlu0.b32.cont [10/16] 0.0, 128
        %262 = vxpose.xlu0.b32.cont [11/16] 0.0, 128
        %263 = vxpose.xlu0.b32.cont [12/16] 0.0, 128
        %264 = vxpose.xlu0.b32.cont [13/16] 0.0, 128
        %265 = vxpose.xlu0.b32.cont [14/16] 0.0, 128
        %266 = vxpose.xlu0.b32.cont [15/16] 0.0, 128
        %267 = vxpose.xlu0.b32.end [16/16] 0.0, 128
        %v268 = vpop.trf.xlu0
        %v269 = vpop.trf.xlu0
        %v270 = vpop.trf.xlu0
        %v271 = vpop.trf.xlu0
        %v272 = vpop.trf.xlu0
        %v273 = vpop.trf.xlu0
        %v274 = vpop.trf.xlu0
        %v275 = vpop.trf.xlu0
        %v276 = vpop.trf.xlu0
        %v277 = vpop.trf.xlu0
        %v278 = vpop.trf.xlu0
        %v279 = vpop.trf.xlu0
        %v280 = vpop.trf.xlu0
        %v281 = vpop.trf.xlu0
        %v282 = vpop.trf.xlu0
        %v283 = vpop.trf.xlu0
        %284 = vxpose.xlu0.b32.start [1/16] %v236, 128
        %285 = vxpose.xlu0.b32.cont [2/16] %v240, 128
        %286 = vxpose.xlu0.b32.cont [3/16] 0.0, 128
        %287 = vxpose.xlu0.b32.cont [4/16] 0.0, 128
        %288 = vxpose.xlu0.b32.cont [5/16] 0.0, 128
        %289 = vxpose.xlu0.b32.cont [6/16] 0.0, 128
        %290 = vxpose.xlu0.b32.cont [7/16] 0.0, 128
        %291 = vxpose.xlu0.b32.cont [8/16] 0.0, 128
        %292 = vxpose.xlu0.b32.cont [9/16] 0.0, 128
        %293 = vxpose.xlu0.b32.cont [10/16] 0.0, 128
        %294 = vxpose.xlu0.b32.cont [11/16] 0.0, 128
        %295 = vxpose.xlu0.b32.cont [12/16] 0.0, 128
        %296 = vxpose.xlu0.b32.cont [13/16] 0.0, 128
        %297 = vxpose.xlu0.b32.cont [14/16] 0.0, 128
        %298 = vxpose.xlu0.b32.cont [15/16] 0.0, 128
        %299 = vxpose.xlu0.b32.end [16/16] 0.0, 128
        %v300 = vpop.trf.xlu0
        %v301 = vpop.trf.xlu0
        %v302 = vpop.trf.xlu0
        %v303 = vpop.trf.xlu0
        %v304 = vpop.trf.xlu0
        %v305 = vpop.trf.xlu0
        %v306 = vpop.trf.xlu0
        %v307 = vpop.trf.xlu0
        %v308 = vpop.trf.xlu0
        %v309 = vpop.trf.xlu0
        %v310 = vpop.trf.xlu0
        %v311 = vpop.trf.xlu0
        %v312 = vpop.trf.xlu0
        %v313 = vpop.trf.xlu0
        %v314 = vpop.trf.xlu0
        %v315 = vpop.trf.xlu0
        %316 = vxpose.xlu0.b32.start [1/16] %v237, 128
        %317 = vxpose.xlu0.b32.cont [2/16] %v241, 128
        %318 = vxpose.xlu0.b32.cont [3/16] 0.0, 128
        %319 = vxpose.xlu0.b32.cont [4/16] 0.0, 128
        %320 = vxpose.xlu0.b32.cont [5/16] 0.0, 128
        %321 = vxpose.xlu0.b32.cont [6/16] 0.0, 128
        %322 = vxpose.xlu0.b32.cont [7/16] 0.0, 128
        %323 = vxpose.xlu0.b32.cont [8/16] 0.0, 128
        %324 = vxpose.xlu0.b32.cont [9/16] 0.0, 128
        %325 = vxpose.xlu0.b32.cont [10/16] 0.0, 128
        %326 = vxpose.xlu0.b32.cont [11/16] 0.0, 128
        %327 = vxpose.xlu0.b32.cont [12/16] 0.0, 128
        %328 = vxpose.xlu0.b32.cont [13/16] 0.0, 128
        %329 = vxpose.xlu0.b32.cont [14/16] 0.0, 128
        %330 = vxpose.xlu0.b32.cont [15/16] 0.0, 128
        %331 = vxpose.xlu0.b32.end [16/16] 0.0, 128
        %v332 = vpop.trf.xlu0
        %v333 = vpop.trf.xlu0
        %v334 = vpop.trf.xlu0
        %v335 = vpop.trf.xlu0
        %v336 = vpop.trf.xlu0
        %v337 = vpop.trf.xlu0
        %v338 = vpop.trf.xlu0
        %v339 = vpop.trf.xlu0
        %v340 = vpop.trf.xlu0
        %v341 = vpop.trf.xlu0
        %v342 = vpop.trf.xlu0
        %v343 = vpop.trf.xlu0
        %v344 = vpop.trf.xlu0
        %v345 = vpop.trf.xlu0
        %v346 = vpop.trf.xlu0
        %v347 = vpop.trf.xlu0
        %348 = vxpose.xlu0.b32.start [1/16] %v238, 128
        %349 = vxpose.xlu0.b32.cont [2/16] %v242, 128
        %350 = vxpose.xlu0.b32.cont [3/16] 0.0, 128
        %351 = vxpose.xlu0.b32.cont [4/16] 0.0, 128
        %352 = vxpose.xlu0.b32.cont [5/16] 0.0, 128
        %353 = vxpose.xlu0.b32.cont [6/16] 0.0, 128
        %354 = vxpose.xlu0.b32.cont [7/16] 0.0, 128
        %355 = vxpose.xlu0.b32.cont [8/16] 0.0, 128
        %356 = vxpose.xlu0.b32.cont [9/16] 0.0, 128
        %357 = vxpose.xlu0.b32.cont [10/16] 0.0, 128
        %358 = vxpose.xlu0.b32.cont [11/16] 0.0, 128
        %359 = vxpose.xlu0.b32.cont [12/16] 0.0, 128
        %360 = vxpose.xlu0.b32.cont [13/16] 0.0, 128
        %361 = vxpose.xlu0.b32.cont [14/16] 0.0, 128
        %362 = vxpose.xlu0.b32.cont [15/16] 0.0, 128
        %363 = vxpose.xlu0.b32.end [16/16] 0.0, 128
        %v364 = vpop.trf.xlu0
        %v365 = vpop.trf.xlu0
        %v366 = vpop.trf.xlu0
        %v367 = vpop.trf.xlu0
        %v368 = vpop.trf.xlu0
        %v369 = vpop.trf.xlu0
        %v370 = vpop.trf.xlu0
        %v371 = vpop.trf.xlu0
        %v372 = vpop.trf.xlu0
        %v373 = vpop.trf.xlu0
        %v374 = vpop.trf.xlu0
        %v375 = vpop.trf.xlu0
        %v376 = vpop.trf.xlu0
        %v377 = vpop.trf.xlu0
        %v378 = vpop.trf.xlu0
        %v379 = vpop.trf.xlu0
        %vm380 = vcmask 130048
        %v382 = vsel %vm380, %v268, 0
        %v385 = vsel %vm380, %v269, 0
        %v388 = vsel %vm380, %v270, 0
        %v391 = vsel %vm380, %v271, 0
        %v394 = vsel %vm380, %v272, 0
        %v397 = vsel %vm380, %v273, 0
        %v400 = vsel %vm380, %v274, 0
        %v403 = vsel %vm380, %v275, 0
        %v406 = vsel %vm380, %v276, 0
        %v409 = vsel %vm380, %v277, 0
        %v412 = vsel %vm380, %v278, 0
        %v415 = vsel %vm380, %v279, 0
        %v418 = vsel %vm380, %v280, 0
        %v421 = vsel %vm380, %v281, 0
        %v424 = vsel %vm380, %v282, 0
        %v427 = vsel %vm380, %v283, 0
        %v430 = vsel %vm380, %v300, 0
        %v433 = vsel %vm380, %v301, 0
        %v436 = vsel %vm380, %v302, 0
        %v439 = vsel %vm380, %v303, 0
        %v442 = vsel %vm380, %v304, 0
        %v445 = vsel %vm380, %v305, 0
        %v448 = vsel %vm380, %v306, 0
        %v451 = vsel %vm380, %v307, 0
        %v454 = vsel %vm380, %v308, 0
        %v457 = vsel %vm380, %v309, 0
        %v460 = vsel %vm380, %v310, 0
        %v463 = vsel %vm380, %v311, 0
        %v466 = vsel %vm380, %v312, 0
        %v469 = vsel %vm380, %v313, 0
        %v472 = vsel %vm380, %v314, 0
        %v475 = vsel %vm380, %v315, 0
        %v478 = vsel %vm380, %v332, 0
        %v481 = vsel %vm380, %v333, 0
        %v484 = vsel %vm380, %v334, 0
        %v487 = vsel %vm380, %v335, 0
        %v490 = vsel %vm380, %v336, 0
        %v493 = vsel %vm380, %v337, 0
        %v496 = vsel %vm380, %v338, 0
        %v499 = vsel %vm380, %v339, 0
        %v502 = vsel %vm380, %v340, 0
        %v505 = vsel %vm380, %v341, 0
        %v508 = vsel %vm380, %v342, 0
        %v511 = vsel %vm380, %v343, 0
        %v514 = vsel %vm380, %v344, 0
        %v517 = vsel %vm380, %v345, 0
        %v520 = vsel %vm380, %v346, 0
        %v523 = vsel %vm380, %v347, 0
        %v526 = vsel %vm380, %v364, 0
        %v529 = vsel %vm380, %v365, 0
        %v532 = vsel %vm380, %v366, 0
        %v535 = vsel %vm380, %v367, 0
        %v538 = vsel %vm380, %v368, 0
        %v541 = vsel %vm380, %v369, 0
        %v544 = vsel %vm380, %v370, 0
        %v547 = vsel %vm380, %v371, 0
        %v550 = vsel %vm380, %v372, 0
        %v553 = vsel %vm380, %v373, 0
        %v556 = vsel %vm380, %v374, 0
        %v559 = vsel %vm380, %v375, 0
        %v562 = vsel %vm380, %v376, 0
        %v565 = vsel %vm380, %v377, 0
        %v568 = vsel %vm380, %v378, 0
        %v571 = vsel %vm380, %v379, 0
        %573 = vmatprep.subr.mxu0 0.0
        %574 = vmatpush1.msra.mxu0 %v243
        %575 = vmatprep.subr.mxu0 0.0
        %576 = vmatpush1.msra.mxu0 %v244
        %577 = vmatprep.subr.mxu0 0.0
        %578 = vmatpush1.msra.mxu0 0.0
        %579 = vmatprep.subr.mxu0 0.0
        %580 = vmatpush1.msra.mxu0 0.0
        %581 = vmatprep.subr.mxu0 0.0
        %582 = vmatpush1.msra.mxu0 0.0
        %583 = vmatprep.subr.mxu0 0.0
        %584 = vmatpush1.msra.mxu0 0.0
        %585 = vmatprep.subr.mxu0 0.0
        %586 = vmatpush1.msra.mxu0 0.0
        %587 = vmatprep.subr.mxu0 0.0
        %588 = vmatpush1.msra.mxu0 0.0
        %589 = vmatprep.subr.mxu0 0.0
        %590 = vmatpush1.msra.mxu0 0.0
        %591 = vmatprep.subr.mxu0 0.0
        %592 = vmatpush1.msra.mxu0 0.0
        %593 = vmatprep.subr.mxu0 0.0
        %594 = vmatpush1.msra.mxu0 0.0
        %595 = vmatprep.subr.mxu0 0.0
        %596 = vmatpush1.msra.mxu0 0.0
        %597 = vmatprep.subr.mxu0 0.0
        %598 = vmatpush1.msra.mxu0 0.0
        %599 = vmatprep.subr.mxu0 0.0
        %600 = vmatpush1.msra.mxu0 0.0
        %601 = vmatprep.subr.mxu0 0.0
        %602 = vmatpush1.msra.mxu0 0.0
        %603 = vmatprep.subr.mxu0 0.0
        %604 = vmatpush1.msra.mxu0 0.0
        %605 = vmatprep.subr.mxu0 0.0
        %606 = vmatpush1.msra.mxu0 0.0
        %607 = vmatprep.subr.mxu0 0.0
        %608 = vmatpush1.msra.mxu0 0.0
        %609 = vmatprep.subr.mxu0 0.0
        %610 = vmatpush1.msra.mxu0 0.0
        %611 = vmatprep.subr.mxu0 0.0
        %612 = vmatpush1.msra.mxu0 0.0
        %613 = vmatprep.subr.mxu0 0.0
        %614 = vmatpush1.msra.mxu0 0.0
        %615 = vmatprep.subr.mxu0 0.0
        %616 = vmatpush1.msra.mxu0 0.0
        %617 = vmatprep.subr.mxu0 0.0
        %618 = vmatpush1.msra.mxu0 0.0
        %619 = vmatprep.subr.mxu0 0.0
        %620 = vmatpush1.msra.mxu0 0.0
        %621 = vmatprep.subr.mxu0 0.0
        %622 = vmatpush1.msra.mxu0 0.0
        %623 = vmatprep.subr.mxu0 0.0
        %624 = vmatpush1.msra.mxu0 0.0
        %625 = vmatprep.subr.mxu0 0.0
        %626 = vmatpush1.msra.mxu0 0.0
        %627 = vmatprep.subr.mxu0 0.0
        %628 = vmatpush1.msra.mxu0 0.0
        %629 = vmatprep.subr.mxu0 0.0
        %630 = vmatpush1.msra.mxu0 0.0
        %631 = vmatprep.subr.mxu0 0.0
        %632 = vmatpush1.msra.mxu0 0.0
        %633 = vmatprep.subr.mxu0 0.0
        %634 = vmatpush1.msra.mxu0 0.0
        %635 = vmatprep.subr.mxu0 0.0
        %636 = vmatpush1.msra.mxu0 0.0
        %637 = vmatprep.mubr.f32.mxu0 0.0
        %638 = vmatmul.mubr.f32.gmra.mrb[0].mxu0 %v382
        %v639 = vpop.f32.mrb[0].mxu0
        %v640 = vadd.f32 %v250, %v639
        %v641 = vpop.f32.mrb[0].mxu0
        %642 = vmatprep.mubr.f32.mxu0 0.0
        %643 = vmatmul.mubr.f32.gmra.mrb[0].mxu0 %v385
        %v644 = vpop.f32.mrb[0].mxu0
        %v645 = vadd.f32 %v250, %v644
        %v646 = vpop.f32.mrb[0].mxu0
        %647 = vmatprep.mubr.f32.mxu0 0.0
        %648 = vmatmul.mubr.f32.gmra.mrb[0].mxu0 %v388
        %v649 = vpop.f32.mrb[0].mxu0
        %v650 = vadd.f32 %v250, %v649
        %v651 = vpop.f32.mrb[0].mxu0
        %652 = vmatprep.mubr.f32.mxu0 0.0
        %653 = vmatmul.mubr.f32.gmra.mrb[0].mxu0 %v391
        %v654 = vpop.f32.mrb[0].mxu0
        %v655 = vadd.f32 %v250, %v654
        %v656 = vpop.f32.mrb[0].mxu0
        %657 = vmatprep.mubr.f32.mxu0 0.0
        %658 = vmatmul.mubr.f32.gmra.mrb[0].mxu0 %v394
        %v659 = vpop.f32.mrb[0].mxu0
        %v660 = vadd.f32 %v250, %v659
        %v661 = vpop.f32.mrb[0].mxu0
        %662 = vmatprep.mubr.f32.mxu0 0.0
        %663 = vmatmul.mubr.f32.gmra.mrb[0].mxu0 %v397
        %v664 = vpop.f32.mrb[0].mxu0
        %v665 = vadd.f32 %v250, %v664
        %v666 = vpop.f32.mrb[0].mxu0
        %667 = vmatprep.mubr.f32.mxu0 0.0
        %668 = vmatmul.mubr.f32.gmra.mrb[0].mxu0 %v400
        %v669 = vpop.f32.mrb[0].mxu0
        %v670 = vadd.f32 %v250, %v669
        %v671 = vpop.f32.mrb[0].mxu0
        %672 = vmatprep.mubr.f32.mxu0 0.0
        %673 = vmatmul.mubr.f32.gmra.mrb[0].mxu0 %v403
        %v674 = vpop.f32.mrb[0].mxu0
        %v675 = vadd.f32 %v250, %v674
        %v676 = vpop.f32.mrb[0].mxu0
        %677 = vmatprep.mubr.f32.mxu0 0.0
        %678 = vmatmul.mubr.f32.gmra.mrb[0].mxu0 %v406
        %v679 = vpop.f32.mrb[0].mxu0
        %v680 = vadd.f32 %v250, %v679
        %v681 = vpop.f32.mrb[0].mxu0
        %682 = vmatprep.mubr.f32.mxu0 0.0
        %683 = vmatmul.mubr.f32.gmra.mrb[0].mxu0 %v409
        %v684 = vpop.f32.mrb[0].mxu0
        %v685 = vadd.f32 %v250, %v684
        %v686 = vpop.f32.mrb[0].mxu0
        %687 = vmatprep.mubr.f32.mxu0 0.0
        %688 = vmatmul.mubr.f32.gmra.mrb[0].mxu0 %v412
        %v689 = vpop.f32.mrb[0].mxu0
        %v690 = vadd.f32 %v250, %v689
        %v691 = vpop.f32.mrb[0].mxu0
        %692 = vmatprep.mubr.f32.mxu0 0.0
        %693 = vmatmul.mubr.f32.gmra.mrb[0].mxu0 %v415
        %v694 = vpop.f32.mrb[0].mxu0
        %v695 = vadd.f32 %v250, %v694
        %v696 = vpop.f32.mrb[0].mxu0
        %697 = vmatprep.mubr.f32.mxu0 0.0
        %698 = vmatmul.mubr.f32.gmra.mrb[0].mxu0 %v418
        %v699 = vpop.f32.mrb[0].mxu0
        %v700 = vadd.f32 %v250, %v699
        %v701 = vpop.f32.mrb[0].mxu0
        %702 = vmatprep.mubr.f32.mxu0 0.0
        %703 = vmatmul.mubr.f32.gmra.mrb[0].mxu0 %v421
        %v704 = vpop.f32.mrb[0].mxu0
        %v705 = vadd.f32 %v250, %v704
        %v706 = vpop.f32.mrb[0].mxu0
        %707 = vmatprep.mubr.f32.mxu0 0.0
        %708 = vmatmul.mubr.f32.gmra.mrb[0].mxu0 %v424
        %v709 = vpop.f32.mrb[0].mxu0
        %v710 = vadd.f32 %v250, %v709
        %v711 = vpop.f32.mrb[0].mxu0
        %712 = vmatprep.mubr.f32.mxu0 0.0
        %713 = vmatmul.mubr.f32.gmra.mrb[0].mxu0 %v427
        %v714 = vpop.f32.mrb[0].mxu0
        %v715 = vadd.f32 %v250, %v714
        %v716 = vpop.f32.mrb[0].mxu0
        %717 = vmatprep.mubr.f32.mxu0 0.0
        %718 = vmatmul.mubr.f32.gmra.mrb[0].mxu0 %v430
        %v719 = vpop.f32.mrb[0].mxu0
        %v720 = vadd.f32 %v250, %v719
        %v721 = vpop.f32.mrb[0].mxu0
        %722 = vmatprep.mubr.f32.mxu0 0.0
        %723 = vmatmul.mubr.f32.gmra.mrb[0].mxu0 %v433
        %v724 = vpop.f32.mrb[0].mxu0
        %v725 = vadd.f32 %v250, %v724
        %v726 = vpop.f32.mrb[0].mxu0
        %727 = vmatprep.mubr.f32.mxu0 0.0
        %728 = vmatmul.mubr.f32.gmra.mrb[0].mxu0 %v436
        %v729 = vpop.f32.mrb[0].mxu0
        %v730 = vadd.f32 %v250, %v729
        %v731 = vpop.f32.mrb[0].mxu0
        %732 = vmatprep.mubr.f32.mxu0 0.0
        %733 = vmatmul.mubr.f32.gmra.mrb[0].mxu0 %v439
        %v734 = vpop.f32.mrb[0].mxu0
        %v735 = vadd.f32 %v250, %v734
        %v736 = vpop.f32.mrb[0].mxu0
        %737 = vmatprep.mubr.f32.mxu0 0.0
        %738 = vmatmul.mubr.f32.gmra.mrb[0].mxu0 %v442
        %v739 = vpop.f32.mrb[0].mxu0
        %v740 = vadd.f32 %v250, %v739
        %v741 = vpop.f32.mrb[0].mxu0
        %742 = vmatprep.mubr.f32.mxu0 0.0
        %743 = vmatmul.mubr.f32.gmra.mrb[0].mxu0 %v445
        %v744 = vpop.f32.mrb[0].mxu0
        %v745 = vadd.f32 %v250, %v744
        %v746 = vpop.f32.mrb[0].mxu0
        %747 = vmatprep.mubr.f32.mxu0 0.0
        %748 = vmatmul.mubr.f32.gmra.mrb[0].mxu0 %v448
        %v749 = vpop.f32.mrb[0].mxu0
        %v750 = vadd.f32 %v250, %v749
        %v751 = vpop.f32.mrb[0].mxu0
        %752 = vmatprep.mubr.f32.mxu0 0.0
        %753 = vmatmul.mubr.f32.gmra.mrb[0].mxu0 %v451
        %v754 = vpop.f32.mrb[0].mxu0
        %v755 = vadd.f32 %v250, %v754
        %v756 = vpop.f32.mrb[0].mxu0
        %757 = vmatprep.mubr.f32.mxu0 0.0
        %758 = vmatmul.mubr.f32.gmra.mrb[0].mxu0 %v454
        %v759 = vpop.f32.mrb[0].mxu0
        %v760 = vadd.f32 %v250, %v759
        %v761 = vpop.f32.mrb[0].mxu0
        %762 = vmatprep.mubr.f32.mxu0 0.0
        %763 = vmatmul.mubr.f32.gmra.mrb[0].mxu0 %v457
        %v764 = vpop.f32.mrb[0].mxu0
        %v765 = vadd.f32 %v250, %v764
        %v766 = vpop.f32.mrb[0].mxu0
        %767 = vmatprep.mubr.f32.mxu0 0.0
        %768 = vmatmul.mubr.f32.gmra.mrb[0].mxu0 %v460
        %v769 = vpop.f32.mrb[0].mxu0
        %v770 = vadd.f32 %v250, %v769
        %v771 = vpop.f32.mrb[0].mxu0
        %772 = vmatprep.mubr.f32.mxu0 0.0
        %773 = vmatmul.mubr.f32.gmra.mrb[0].mxu0 %v463
        %v774 = vpop.f32.mrb[0].mxu0
        %v775 = vadd.f32 %v250, %v774
        %v776 = vpop.f32.mrb[0].mxu0
        %777 = vmatprep.mubr.f32.mxu0 0.0
        %778 = vmatmul.mubr.f32.gmra.mrb[0].mxu0 %v466
        %v779 = vpop.f32.mrb[0].mxu0
        %v780 = vadd.f32 %v250, %v779
        %v781 = vpop.f32.mrb[0].mxu0
        %782 = vmatprep.mubr.f32.mxu0 0.0
        %783 = vmatmul.mubr.f32.gmra.mrb[0].mxu0 %v469
        %v784 = vpop.f32.mrb[0].mxu0
        %v785 = vadd.f32 %v250, %v784
        %v786 = vpop.f32.mrb[0].mxu0
        %787 = vmatprep.mubr.f32.mxu0 0.0
        %788 = vmatmul.mubr.f32.gmra.mrb[0].mxu0 %v472
        %v789 = vpop.f32.mrb[0].mxu0
        %v790 = vadd.f32 %v250, %v789
        %v791 = vpop.f32.mrb[0].mxu0
        %792 = vmatprep.mubr.f32.mxu0 0.0
        %793 = vmatmul.mubr.f32.gmra.mrb[0].mxu0 %v475
        %v794 = vpop.f32.mrb[0].mxu0
        %v795 = vadd.f32 %v250, %v794
        %v796 = vpop.f32.mrb[0].mxu0
        %797 = vmatprep.mubr.f32.mxu0 0.0
        %798 = vmatmul.mubr.f32.gmra.mrb[0].mxu0 %v478
        %v799 = vpop.f32.mrb[0].mxu0
        %v800 = vadd.f32 %v250, %v799
        %v801 = vpop.f32.mrb[0].mxu0
        %802 = vmatprep.mubr.f32.mxu0 0.0
        %803 = vmatmul.mubr.f32.gmra.mrb[0].mxu0 %v481
        %v804 = vpop.f32.mrb[0].mxu0
        %v805 = vadd.f32 %v250, %v804
        %v806 = vpop.f32.mrb[0].mxu0
        %807 = vmatprep.mubr.f32.mxu0 0.0
        %808 = vmatmul.mubr.f32.gmra.mrb[0].mxu0 %v484
        %v809 = vpop.f32.mrb[0].mxu0
        %v810 = vadd.f32 %v250, %v809
        %v811 = vpop.f32.mrb[0].mxu0
        %812 = vmatprep.mubr.f32.mxu0 0.0
        %813 = vmatmul.mubr.f32.gmra.mrb[0].mxu0 %v487
        %v814 = vpop.f32.mrb[0].mxu0
        %v815 = vadd.f32 %v250, %v814
        %v816 = vpop.f32.mrb[0].mxu0
        %817 = vmatprep.mubr.f32.mxu0 0.0
        %818 = vmatmul.mubr.f32.gmra.mrb[0].mxu0 %v490
        %v819 = vpop.f32.mrb[0].mxu0
        %v820 = vadd.f32 %v250, %v819
        %v821 = vpop.f32.mrb[0].mxu0
        %822 = vmatprep.mubr.f32.mxu0 0.0
        %823 = vmatmul.mubr.f32.gmra.mrb[0].mxu0 %v493
        %v824 = vpop.f32.mrb[0].mxu0
        %v825 = vadd.f32 %v250, %v824
        %v826 = vpop.f32.mrb[0].mxu0
        %827 = vmatprep.mubr.f32.mxu0 0.0
        %828 = vmatmul.mubr.f32.gmra.mrb[0].mxu0 %v496
        %v829 = vpop.f32.mrb[0].mxu0
        %v830 = vadd.f32 %v250, %v829
        %v831 = vpop.f32.mrb[0].mxu0
        %832 = vmatprep.mubr.f32.mxu0 0.0
        %833 = vmatmul.mubr.f32.gmra.mrb[0].mxu0 %v499
        %v834 = vpop.f32.mrb[0].mxu0
        %v835 = vadd.f32 %v250, %v834
        %v836 = vpop.f32.mrb[0].mxu0
        %837 = vmatprep.mubr.f32.mxu0 0.0
        %838 = vmatmul.mubr.f32.gmra.mrb[0].mxu0 %v502
        %v839 = vpop.f32.mrb[0].mxu0
        %v840 = vadd.f32 %v250, %v839
        %v841 = vpop.f32.mrb[0].mxu0
        %842 = vmatprep.mubr.f32.mxu0 0.0
        %843 = vmatmul.mubr.f32.gmra.mrb[0].mxu0 %v505
        %v844 = vpop.f32.mrb[0].mxu0
        %v845 = vadd.f32 %v250, %v844
        %v846 = vpop.f32.mrb[0].mxu0
        %847 = vmatprep.mubr.f32.mxu0 0.0
        %848 = vmatmul.mubr.f32.gmra.mrb[0].mxu0 %v508
        %v849 = vpop.f32.mrb[0].mxu0
        %v850 = vadd.f32 %v250, %v849
        %v851 = vpop.f32.mrb[0].mxu0
        %852 = vmatprep.mubr.f32.mxu0 0.0
        %853 = vmatmul.mubr.f32.gmra.mrb[0].mxu0 %v511
        %v854 = vpop.f32.mrb[0].mxu0
        %v855 = vadd.f32 %v250, %v854
        %v856 = vpop.f32.mrb[0].mxu0
        %857 = vmatprep.mubr.f32.mxu0 0.0
        %858 = vmatmul.mubr.f32.gmra.mrb[0].mxu0 %v514
        %v859 = vpop.f32.mrb[0].mxu0
        %v860 = vadd.f32 %v250, %v859
        %v861 = vpop.f32.mrb[0].mxu0
        %862 = vmatprep.mubr.f32.mxu0 0.0
        %863 = vmatmul.mubr.f32.gmra.mrb[0].mxu0 %v517
        %v864 = vpop.f32.mrb[0].mxu0
        %v865 = vadd.f32 %v250, %v864
        %v866 = vpop.f32.mrb[0].mxu0
        %867 = vmatprep.mubr.f32.mxu0 0.0
        %868 = vmatmul.mubr.f32.gmra.mrb[0].mxu0 %v520
        %v869 = vpop.f32.mrb[0].mxu0
        %v870 = vadd.f32 %v250, %v869
        %v871 = vpop.f32.mrb[0].mxu0
        %872 = vmatprep.mubr.f32.mxu0 0.0
        %873 = vmatmul.mubr.f32.gmra.mrb[0].mxu0 %v523
        %v874 = vpop.f32.mrb[0].mxu0
        %v875 = vadd.f32 %v250, %v874
        %v876 = vpop.f32.mrb[0].mxu0
        %877 = vmatprep.mubr.f32.mxu0 0.0
        %878 = vmatmul.mubr.f32.gmra.mrb[0].mxu0 %v526
        %v879 = vpop.f32.mrb[0].mxu0
        %v880 = vadd.f32 %v250, %v879
        %v881 = vpop.f32.mrb[0].mxu0
        %882 = vmatprep.mubr.f32.mxu0 0.0
        %883 = vmatmul.mubr.f32.gmra.mrb[0].mxu0 %v529
        %v884 = vpop.f32.mrb[0].mxu0
        %v885 = vadd.f32 %v250, %v884
        %v886 = vpop.f32.mrb[0].mxu0
        %887 = vmatprep.mubr.f32.mxu0 0.0
        %888 = vmatmul.mubr.f32.gmra.mrb[0].mxu0 %v532
        %v889 = vpop.f32.mrb[0].mxu0
        %v890 = vadd.f32 %v250, %v889
        %v891 = vpop.f32.mrb[0].mxu0
        %892 = vmatprep.mubr.f32.mxu0 0.0
        %893 = vmatmul.mubr.f32.gmra.mrb[0].mxu0 %v535
        %v894 = vpop.f32.mrb[0].mxu0
        %v895 = vadd.f32 %v250, %v894
        %v896 = vpop.f32.mrb[0].mxu0
        %897 = vmatprep.mubr.f32.mxu0 0.0
        %898 = vmatmul.mubr.f32.gmra.mrb[0].mxu0 %v538
        %v899 = vpop.f32.mrb[0].mxu0
        %v900 = vadd.f32 %v250, %v899
        %v901 = vpop.f32.mrb[0].mxu0
        %902 = vmatprep.mubr.f32.mxu0 0.0
        %903 = vmatmul.mubr.f32.gmra.mrb[0].mxu0 %v541
        %v904 = vpop.f32.mrb[0].mxu0
        %v905 = vadd.f32 %v250, %v904
        %v906 = vpop.f32.mrb[0].mxu0
        %907 = vmatprep.mubr.f32.mxu0 0.0
        %908 = vmatmul.mubr.f32.gmra.mrb[0].mxu0 %v544
        %v909 = vpop.f32.mrb[0].mxu0
        %v910 = vadd.f32 %v250, %v909
        %v911 = vpop.f32.mrb[0].mxu0
        %912 = vmatprep.mubr.f32.mxu0 0.0
        %913 = vmatmul.mubr.f32.gmra.mrb[0].mxu0 %v547
        %v914 = vpop.f32.mrb[0].mxu0
        %v915 = vadd.f32 %v250, %v914
        %v916 = vpop.f32.mrb[0].mxu0
        %917 = vmatprep.mubr.f32.mxu0 0.0
        %918 = vmatmul.mubr.f32.gmra.mrb[0].mxu0 %v550
        %v919 = vpop.f32.mrb[0].mxu0
        %v920 = vadd.f32 %v250, %v919
        %v921 = vpop.f32.mrb[0].mxu0
        %922 = vmatprep.mubr.f32.mxu0 0.0
        %923 = vmatmul.mubr.f32.gmra.mrb[0].mxu0 %v553
        %v924 = vpop.f32.mrb[0].mxu0
        %v925 = vadd.f32 %v250, %v924
        %v926 = vpop.f32.mrb[0].mxu0
        %927 = vmatprep.mubr.f32.mxu0 0.0
        %928 = vmatmul.mubr.f32.gmra.mrb[0].mxu0 %v556
        %v929 = vpop.f32.mrb[0].mxu0
        %v930 = vadd.f32 %v250, %v929
        %v931 = vpop.f32.mrb[0].mxu0
        %932 = vmatprep.mubr.f32.mxu0 0.0
        %933 = vmatmul.mubr.f32.gmra.mrb[0].mxu0 %v559
        %v934 = vpop.f32.mrb[0].mxu0
        %v935 = vadd.f32 %v250, %v934
        %v936 = vpop.f32.mrb[0].mxu0
        %937 = vmatprep.mubr.f32.mxu0 0.0
        %938 = vmatmul.mubr.f32.gmra.mrb[0].mxu0 %v562
        %v939 = vpop.f32.mrb[0].mxu0
        %v940 = vadd.f32 %v250, %v939
        %v941 = vpop.f32.mrb[0].mxu0
        %942 = vmatprep.mubr.f32.mxu0 0.0
        %943 = vmatmul.mubr.f32.gmra.mrb[0].mxu0 %v565
        %v944 = vpop.f32.mrb[0].mxu0
        %v945 = vadd.f32 %v250, %v944
        %v946 = vpop.f32.mrb[0].mxu0
        %947 = vmatprep.mubr.f32.mxu0 0.0
        %948 = vmatmul.mubr.f32.gmra.mrb[0].mxu0 %v568
        %v949 = vpop.f32.mrb[0].mxu0
        %v950 = vadd.f32 %v250, %v949
        %v951 = vpop.f32.mrb[0].mxu0
        %952 = vmatprep.mubr.f32.mxu0 0.0
        %953 = vmatmul.mubr.f32.gmra.mrb[0].mxu0 %v571
        %v954 = vpop.f32.mrb[0].mxu0
        %v955 = vadd.f32 %v250, %v954
        %v956 = vpop.f32.mrb[0].mxu0
        %957 = vdwg.mxu0
        %vm958 = vcmask 261120
        %959 = vst.msk [vmem:[%s224] sm:$0xff] %vm958, %v640
        %960 = vst.msk [vmem:[%s224 + $0x8] sm:$0xff] %vm958, %v645
        %961 = vst.msk [vmem:[%s224 + $0x10] sm:$0xff] %vm958, %v650
        %962 = vst.msk [vmem:[%s224 + $0x18] sm:$0xff] %vm958, %v655
        %963 = vst.msk [vmem:[%s224 + $0x20] sm:$0xff] %vm958, %v660
        %964 = vst.msk [vmem:[%s224 + $0x28] sm:$0xff] %vm958, %v665
        %965 = vst.msk [vmem:[%s224 + $0x30] sm:$0xff] %vm958, %v670
        %966 = vst.msk [vmem:[%s224 + $0x38] sm:$0xff] %vm958, %v675
        %967 = vst.msk [vmem:[%s224 + $0x40] sm:$0xff] %vm958, %v680
        %968 = vst.msk [vmem:[%s224 + $0x48] sm:$0xff] %vm958, %v685
        %969 = vst.msk [vmem:[%s224 + $0x50] sm:$0xff] %vm958, %v690
        %970 = vst.msk [vmem:[%s224 + $0x58] sm:$0xff] %vm958, %v695
        %971 = vst.msk [vmem:[%s224 + $0x60] sm:$0xff] %vm958, %v700
        %972 = vst.msk [vmem:[%s224 + $0x68] sm:$0xff] %vm958, %v705
        %973 = vst.msk [vmem:[%s224 + $0x70] sm:$0xff] %vm958, %v710
        %974 = vst.msk [vmem:[%s224 + $0x78] sm:$0xff] %vm958, %v715
        %975 = vst.msk [vmem:[%s224 + $0x80] sm:$0xff] %vm958, %v720
        %976 = vst.msk [vmem:[%s224 + $0x88] sm:$0xff] %vm958, %v725
        %977 = vst.msk [vmem:[%s224 + $0x90] sm:$0xff] %vm958, %v730
        %978 = vst.msk [vmem:[%s224 + $0x98] sm:$0xff] %vm958, %v735
        %979 = vst.msk [vmem:[%s224 + $0xa0] sm:$0xff] %vm958, %v740
        %980 = vst.msk [vmem:[%s224 + $0xa8] sm:$0xff] %vm958, %v745
        %981 = vst.msk [vmem:[%s224 + $0xb0] sm:$0xff] %vm958, %v750
        %982 = vst.msk [vmem:[%s224 + $0xb8] sm:$0xff] %vm958, %v755
        %983 = vst.msk [vmem:[%s224 + $0xc0] sm:$0xff] %vm958, %v760
        %984 = vst.msk [vmem:[%s224 + $0xc8] sm:$0xff] %vm958, %v765
        %985 = vst.msk [vmem:[%s224 + $0xd0] sm:$0xff] %vm958, %v770
        %986 = vst.msk [vmem:[%s224 + $0xd8] sm:$0xff] %vm958, %v775
        %987 = vst.msk [vmem:[%s224 + $0xe0] sm:$0xff] %vm958, %v780
        %988 = vst.msk [vmem:[%s224 + $0xe8] sm:$0xff] %vm958, %v785
        %989 = vst.msk [vmem:[%s224 + $0xf0] sm:$0xff] %vm958, %v790
        %990 = vst.msk [vmem:[%s224 + $0xf8] sm:$0xff] %vm958, %v795
        %991 = vst.msk [vmem:[%s224 + $0x100] sm:$0xff] %vm958, %v800
        %992 = vst.msk [vmem:[%s224 + $0x108] sm:$0xff] %vm958, %v805
        %993 = vst.msk [vmem:[%s224 + $0x110] sm:$0xff] %vm958, %v810
        %994 = vst.msk [vmem:[%s224 + $0x118] sm:$0xff] %vm958, %v815
        %995 = vst.msk [vmem:[%s224 + $0x120] sm:$0xff] %vm958, %v820
        %996 = vst.msk [vmem:[%s224 + $0x128] sm:$0xff] %vm958, %v825
        %997 = vst.msk [vmem:[%s224 + $0x130] sm:$0xff] %vm958, %v830
        %998 = vst.msk [vmem:[%s224 + $0x138] sm:$0xff] %vm958, %v835
        %999 = vst.msk [vmem:[%s224 + $0x140] sm:$0xff] %vm958, %v840
        %1000 = vst.msk [vmem:[%s224 + $0x148] sm:$0xff] %vm958, %v845
        %1001 = vst.msk [vmem:[%s224 + $0x150] sm:$0xff] %vm958, %v850
        %1002 = vst.msk [vmem:[%s224 + $0x158] sm:$0xff] %vm958, %v855
        %1003 = vst.msk [vmem:[%s224 + $0x160] sm:$0xff] %vm958, %v860
        %1004 = vst.msk [vmem:[%s224 + $0x168] sm:$0xff] %vm958, %v865
        %1005 = vst.msk [vmem:[%s224 + $0x170] sm:$0xff] %vm958, %v870
        %1006 = vst.msk [vmem:[%s224 + $0x178] sm:$0xff] %vm958, %v875
        %1007 = vst.msk [vmem:[%s224 + $0x180] sm:$0xff] %vm958, %v880
        %1008 = vst.msk [vmem:[%s224 + $0x188] sm:$0xff] %vm958, %v885
        %1009 = vst.msk [vmem:[%s224 + $0x190] sm:$0xff] %vm958, %v890
        %1010 = vst.msk [vmem:[%s224 + $0x198] sm:$0xff] %vm958, %v895
        %1011 = vst.msk [vmem:[%s224 + $0x1a0] sm:$0xff] %vm958, %v900
        %1012 = vst.msk [vmem:[%s224 + $0x1a8] sm:$0xff] %vm958, %v905
        %1013 = vst.msk [vmem:[%s224 + $0x1b0] sm:$0xff] %vm958, %v910
        %1014 = vst.msk [vmem:[%s224 + $0x1b8] sm:$0xff] %vm958, %v915
        %1015 = vst.msk [vmem:[%s224 + $0x1c0] sm:$0xff] %vm958, %v920
        %1016 = vst.msk [vmem:[%s224 + $0x1c8] sm:$0xff] %vm958, %v925
        %1017 = vst.msk [vmem:[%s224 + $0x1d0] sm:$0xff] %vm958, %v930
        %1018 = vst.msk [vmem:[%s224 + $0x1d8] sm:$0xff] %vm958, %v935
        %1019 = vst.msk [vmem:[%s224 + $0x1e0] sm:$0xff] %vm958, %v940
        %1020 = vst.msk [vmem:[%s224 + $0x1e8] sm:$0xff] %vm958, %v945
        %1021 = vst.msk [vmem:[%s224 + $0x1f0] sm:$0xff] %vm958, %v950
        %1022 = vst.msk [vmem:[%s224 + $0x1f8] sm:$0xff] %vm958, %v955
        %s1023 = sand.u32 %s110, 1
        %s1024 = sand.u32 %s110, 1
        %s1025 = smul.addr %s1024, 512
        %s1026 = scalar_lea.vmem [#allocation6], %s1025
        // Predicated region
        $region41: #{tpu_custom_call.1} parent=31 // pred_check
          %p1027 = pneg %p120
        $region42: #{tpu_custom_call.1} parent=31 // pred_check_branch
          %1029 = sbr.rel (%p1027) target = $region44
        $region43: #{tpu_custom_call.1} parent=31 // pred_region
          %s1030 = smul.u32 64, %s23
          %s1031 = ssub.s32 80, %s1030
          %p1032 = scmp.lt.s32.totalorder %s1031, 64
          %s1033 = scalar_select %p1032, %s1031, 64
          %s1034 = smul.u32 128, %s1033
          %p1035 = scmp.ne.s32.totalorder 0, %s1034
          %s1036 = smul.addr %s22, 80
          %s1037 = sadd.s32 %s1030, %s1036
          %s1038 = smul.addr %s1037, 8
          %s1039 = scalar_lea.vmem %s3, %s1038
          // Predicated region
          $region45: #{tpu_custom_call.1} parent=43 // pred_check
            %p1040 = pneg %p1035
          $region46: #{tpu_custom_call.1} parent=43 // pred_check_branch
            %1042 = sbr.rel (%p1040) target = $region48
          $region47: #{tpu_custom_call.1} parent=43 // pred_region
            // Predicated region
            $region49: #{tpu_custom_call.1} parent=47 // pred_check
              _
            $region50: #{tpu_custom_call.1} parent=47 // pred_check_branch
              %1044 = sbr.rel (0) target = $region52
            $region51: #{tpu_custom_call.1} parent=47 // pred_region
              // Predicated region
              $region71: #{tpu_custom_call.1} parent=51 // pred_check
                _
              $region72: #{tpu_custom_call.1} parent=51 // pred_check_branch
                %1219 = sbr.rel (0) target = $region74
              $region73: #{tpu_custom_call.1} parent=51 // pred_region
                %s1220 = sshrl.u32 %s1033, 6
                // While loop
                $region75: #{tpu_custom_call.1} parent=73 // loop_pre_header
                  _
                $region76: #{tpu_custom_call.1} parent=73 // loop_header
                  %s1222 = sphi 0, %s1224
                  %p1223 = scmp.ge.s32.totalorder %s1222, %s1220
                  %s1227 = sphi 0, %s1360
                  %s1228 = sphi %s1026, %s1363
                  %s1229 = sphi %s1039, %s1364
                $region77: #{tpu_custom_call.1} parent=73 // loop_header_branch
                  %1226 = sbr.rel (%p1223) target = $region81
                $region78: #{tpu_custom_call.1} parent=73 // loop_body
                  %v1230 = vld [vmem:[%s1228] sm:$0xff]
                  %1231 = vst [vmem:[%s1229] sm:$0xff] %v1230
                  %v1232 = vld [vmem:[%s1228 + $0x8] sm:$0xff]
                  %1233 = vst [vmem:[%s1229 + $0x8] sm:$0xff] %v1232
                  %v1234 = vld [vmem:[%s1228 + $0x10] sm:$0xff]
                  %1235 = vst [vmem:[%s1229 + $0x10] sm:$0xff] %v1234
                  %v1236 = vld [vmem:[%s1228 + $0x18] sm:$0xff]
                  %1237 = vst [vmem:[%s1229 + $0x18] sm:$0xff] %v1236
                  %v1238 = vld [vmem:[%s1228 + $0x20] sm:$0xff]
                  %1239 = vst [vmem:[%s1229 + $0x20] sm:$0xff] %v1238
                  %v1240 = vld [vmem:[%s1228 + $0x28] sm:$0xff]
                  %1241 = vst [vmem:[%s1229 + $0x28] sm:$0xff] %v1240
                  %v1242 = vld [vmem:[%s1228 + $0x30] sm:$0xff]
                  %1243 = vst [vmem:[%s1229 + $0x30] sm:$0xff] %v1242
                  %v1244 = vld [vmem:[%s1228 + $0x38] sm:$0xff]
                  %1245 = vst [vmem:[%s1229 + $0x38] sm:$0xff] %v1244
                  %v1246 = vld [vmem:[%s1228 + $0x40] sm:$0xff]
                  %1247 = vst [vmem:[%s1229 + $0x40] sm:$0xff] %v1246
                  %v1248 = vld [vmem:[%s1228 + $0x48] sm:$0xff]
                  %1249 = vst [vmem:[%s1229 + $0x48] sm:$0xff] %v1248
                  %v1250 = vld [vmem:[%s1228 + $0x50] sm:$0xff]
                  %1251 = vst [vmem:[%s1229 + $0x50] sm:$0xff] %v1250
                  %v1252 = vld [vmem:[%s1228 + $0x58] sm:$0xff]
                  %1253 = vst [vmem:[%s1229 + $0x58] sm:$0xff] %v1252
                  %v1254 = vld [vmem:[%s1228 + $0x60] sm:$0xff]
                  %1255 = vst [vmem:[%s1229 + $0x60] sm:$0xff] %v1254
                  %v1256 = vld [vmem:[%s1228 + $0x68] sm:$0xff]
                  %1257 = vst [vmem:[%s1229 + $0x68] sm:$0xff] %v1256
                  %v1258 = vld [vmem:[%s1228 + $0x70] sm:$0xff]
                  %1259 = vst [vmem:[%s1229 + $0x70] sm:$0xff] %v1258
                  %v1260 = vld [vmem:[%s1228 + $0x78] sm:$0xff]
                  %1261 = vst [vmem:[%s1229 + $0x78] sm:$0xff] %v1260
                  %v1262 = vld [vmem:[%s1228 + $0x80] sm:$0xff]
                  %1263 = vst [vmem:[%s1229 + $0x80] sm:$0xff] %v1262
                  %v1264 = vld [vmem:[%s1228 + $0x88] sm:$0xff]
                  %1265 = vst [vmem:[%s1229 + $0x88] sm:$0xff] %v1264
                  %v1266 = vld [vmem:[%s1228 + $0x90] sm:$0xff]
                  %1267 = vst [vmem:[%s1229 + $0x90] sm:$0xff] %v1266
                  %v1268 = vld [vmem:[%s1228 + $0x98] sm:$0xff]
                  %1269 = vst [vmem:[%s1229 + $0x98] sm:$0xff] %v1268
                  %v1270 = vld [vmem:[%s1228 + $0xa0] sm:$0xff]
                  %1271 = vst [vmem:[%s1229 + $0xa0] sm:$0xff] %v1270
                  %v1272 = vld [vmem:[%s1228 + $0xa8] sm:$0xff]
                  %1273 = vst [vmem:[%s1229 + $0xa8] sm:$0xff] %v1272
                  %v1274 = vld [vmem:[%s1228 + $0xb0] sm:$0xff]
                  %1275 = vst [vmem:[%s1229 + $0xb0] sm:$0xff] %v1274
                  %v1276 = vld [vmem:[%s1228 + $0xb8] sm:$0xff]
                  %1277 = vst [vmem:[%s1229 + $0xb8] sm:$0xff] %v1276
                  %v1278 = vld [vmem:[%s1228 + $0xc0] sm:$0xff]
                  %1279 = vst [vmem:[%s1229 + $0xc0] sm:$0xff] %v1278
                  %v1280 = vld [vmem:[%s1228 + $0xc8] sm:$0xff]
                  %1281 = vst [vmem:[%s1229 + $0xc8] sm:$0xff] %v1280
                  %v1282 = vld [vmem:[%s1228 + $0xd0] sm:$0xff]
                  %1283 = vst [vmem:[%s1229 + $0xd0] sm:$0xff] %v1282
                  %v1284 = vld [vmem:[%s1228 + $0xd8] sm:$0xff]
                  %1285 = vst [vmem:[%s1229 + $0xd8] sm:$0xff] %v1284
                  %v1286 = vld [vmem:[%s1228 + $0xe0] sm:$0xff]
                  %1287 = vst [vmem:[%s1229 + $0xe0] sm:$0xff] %v1286
                  %v1288 = vld [vmem:[%s1228 + $0xe8] sm:$0xff]
                  %1289 = vst [vmem:[%s1229 + $0xe8] sm:$0xff] %v1288
                  %v1290 = vld [vmem:[%s1228 + $0xf0] sm:$0xff]
                  %1291 = vst [vmem:[%s1229 + $0xf0] sm:$0xff] %v1290
                  %v1292 = vld [vmem:[%s1228 + $0xf8] sm:$0xff]
                  %1293 = vst [vmem:[%s1229 + $0xf8] sm:$0xff] %v1292
                  %v1294 = vld [vmem:[%s1228 + $0x100] sm:$0xff]
                  %1295 = vst [vmem:[%s1229 + $0x100] sm:$0xff] %v1294
                  %v1296 = vld [vmem:[%s1228 + $0x108] sm:$0xff]
                  %1297 = vst [vmem:[%s1229 + $0x108] sm:$0xff] %v1296
                  %v1298 = vld [vmem:[%s1228 + $0x110] sm:$0xff]
                  %1299 = vst [vmem:[%s1229 + $0x110] sm:$0xff] %v1298
                  %v1300 = vld [vmem:[%s1228 + $0x118] sm:$0xff]
                  %1301 = vst [vmem:[%s1229 + $0x118] sm:$0xff] %v1300
                  %v1302 = vld [vmem:[%s1228 + $0x120] sm:$0xff]
                  %1303 = vst [vmem:[%s1229 + $0x120] sm:$0xff] %v1302
                  %v1304 = vld [vmem:[%s1228 + $0x128] sm:$0xff]
                  %1305 = vst [vmem:[%s1229 + $0x128] sm:$0xff] %v1304
                  %v1306 = vld [vmem:[%s1228 + $0x130] sm:$0xff]
                  %1307 = vst [vmem:[%s1229 + $0x130] sm:$0xff] %v1306
                  %v1308 = vld [vmem:[%s1228 + $0x138] sm:$0xff]
                  %1309 = vst [vmem:[%s1229 + $0x138] sm:$0xff] %v1308
                  %v1310 = vld [vmem:[%s1228 + $0x140] sm:$0xff]
                  %1311 = vst [vmem:[%s1229 + $0x140] sm:$0xff] %v1310
                  %v1312 = vld [vmem:[%s1228 + $0x148] sm:$0xff]
                  %1313 = vst [vmem:[%s1229 + $0x148] sm:$0xff] %v1312
                  %v1314 = vld [vmem:[%s1228 + $0x150] sm:$0xff]
                  %1315 = vst [vmem:[%s1229 + $0x150] sm:$0xff] %v1314
                  %v1316 = vld [vmem:[%s1228 + $0x158] sm:$0xff]
                  %1317 = vst [vmem:[%s1229 + $0x158] sm:$0xff] %v1316
                  %v1318 = vld [vmem:[%s1228 + $0x160] sm:$0xff]
                  %1319 = vst [vmem:[%s1229 + $0x160] sm:$0xff] %v1318
                  %v1320 = vld [vmem:[%s1228 + $0x168] sm:$0xff]
                  %1321 = vst [vmem:[%s1229 + $0x168] sm:$0xff] %v1320
                  %v1322 = vld [vmem:[%s1228 + $0x170] sm:$0xff]
                  %1323 = vst [vmem:[%s1229 + $0x170] sm:$0xff] %v1322
                  %v1324 = vld [vmem:[%s1228 + $0x178] sm:$0xff]
                  %1325 = vst [vmem:[%s1229 + $0x178] sm:$0xff] %v1324
                  %v1326 = vld [vmem:[%s1228 + $0x180] sm:$0xff]
                  %1327 = vst [vmem:[%s1229 + $0x180] sm:$0xff] %v1326
                  %v1328 = vld [vmem:[%s1228 + $0x188] sm:$0xff]
                  %1329 = vst [vmem:[%s1229 + $0x188] sm:$0xff] %v1328
                  %v1330 = vld [vmem:[%s1228 + $0x190] sm:$0xff]
                  %1331 = vst [vmem:[%s1229 + $0x190] sm:$0xff] %v1330
                  %v1332 = vld [vmem:[%s1228 + $0x198] sm:$0xff]
                  %1333 = vst [vmem:[%s1229 + $0x198] sm:$0xff] %v1332
                  %v1334 = vld [vmem:[%s1228 + $0x1a0] sm:$0xff]
                  %1335 = vst [vmem:[%s1229 + $0x1a0] sm:$0xff] %v1334
                  %v1336 = vld [vmem:[%s1228 + $0x1a8] sm:$0xff]
                  %1337 = vst [vmem:[%s1229 + $0x1a8] sm:$0xff] %v1336
                  %v1338 = vld [vmem:[%s1228 + $0x1b0] sm:$0xff]
                  %1339 = vst [vmem:[%s1229 + $0x1b0] sm:$0xff] %v1338
                  %v1340 = vld [vmem:[%s1228 + $0x1b8] sm:$0xff]
                  %1341 = vst [vmem:[%s1229 + $0x1b8] sm:$0xff] %v1340
                  %v1342 = vld [vmem:[%s1228 + $0x1c0] sm:$0xff]
                  %1343 = vst [vmem:[%s1229 + $0x1c0] sm:$0xff] %v1342
                  %v1344 = vld [vmem:[%s1228 + $0x1c8] sm:$0xff]
                  %1345 = vst [vmem:[%s1229 + $0x1c8] sm:$0xff] %v1344
                  %v1346 = vld [vmem:[%s1228 + $0x1d0] sm:$0xff]
                  %1347 = vst [vmem:[%s1229 + $0x1d0] sm:$0xff] %v1346
                  %v1348 = vld [vmem:[%s1228 + $0x1d8] sm:$0xff]
                  %1349 = vst [vmem:[%s1229 + $0x1d8] sm:$0xff] %v1348
                  %v1350 = vld [vmem:[%s1228 + $0x1e0] sm:$0xff]
                  %1351 = vst [vmem:[%s1229 + $0x1e0] sm:$0xff] %v1350
                  %v1352 = vld [vmem:[%s1228 + $0x1e8] sm:$0xff]
                  %1353 = vst [vmem:[%s1229 + $0x1e8] sm:$0xff] %v1352
                  %v1354 = vld [vmem:[%s1228 + $0x1f0] sm:$0xff]
                  %1355 = vst [vmem:[%s1229 + $0x1f0] sm:$0xff] %v1354
                  %v1356 = vld [vmem:[%s1228 + $0x1f8] sm:$0xff]
                  %1357 = vst [vmem:[%s1229 + $0x1f8] sm:$0xff] %v1356
                  %s1358 = sadd.s32 1, %s1227
                  %p1359 = scmp.ge.s32.totalorder %s1358, %s1220
                  %s1360 = scalar_select %p1359, 0, %s1358
                  %s1361 = smul.u32 %s1360, 512
                  %s1362 = smul.u32 %s1360, 512
                  %s1363 = scalar_lea.vmem %s1026, %s1361 [#allocation6]
                  %s1364 = scalar_lea.vmem %s1039, %s1362
                $region79: #{tpu_custom_call.1} parent=73 // loop_footer
                  %s1224 = sadd.s32 %s1222, 1
                $region80: #{tpu_custom_call.1} parent=73 // loop_footer_branch
                  %1221 = sbr.rel target = $region76
                $region81: #{tpu_custom_call.1} parent=73 // loop_exit
                  _
                %s1365 = sshrl.u32 %s1033, 6
                %s1366 = sand.u32 %s1033, 63
                %s1367 = smul.u32 %s1365, 64
                %s1368 = smul.u32 8, %s1367
                %s1369 = scalar_lea.vmem %s1026, %s1368 [#allocation6]
                %s1370 = smul.u32 8, %s1367
                %s1371 = scalar_lea.vmem %s1039, %s1370
                // While loop
                $region82: #{tpu_custom_call.1} parent=73 // loop_pre_header
                  _
                $region83: #{tpu_custom_call.1} parent=73 // loop_header
                  %s1373 = sphi 0, %s1375
                  %p1374 = scmp.ge.s32.totalorder %s1373, %s1366
                  %s1378 = sphi 0, %s1385
                  %s1379 = sphi %s1369, %s1388
                  %s1380 = sphi %s1371, %s1389
                $region84: #{tpu_custom_call.1} parent=73 // loop_header_branch
                  %1377 = sbr.rel (%p1374) target = $region88
                $region85: #{tpu_custom_call.1} parent=73 // loop_body
                  %v1381 = vld [vmem:[%s1379] sm:$0xff]
                  %1382 = vst [vmem:[%s1380] sm:$0xff] %v1381
                  %s1383 = sadd.s32 1, %s1378
                  %p1384 = scmp.ge.s32.totalorder %s1383, %s1366
                  %s1385 = scalar_select %p1384, 0, %s1383
                  %s1386 = smul.u32 %s1385, 8
                  %s1387 = smul.u32 %s1385, 8
                  %s1388 = scalar_lea.vmem %s1369, %s1386 [#allocation6]
                  %s1389 = scalar_lea.vmem %s1371, %s1387
                $region86: #{tpu_custom_call.1} parent=73 // loop_footer
                  %s1375 = sadd.s32 %s1373, 1
                $region87: #{tpu_custom_call.1} parent=73 // loop_footer_branch
                  %1372 = sbr.rel target = $region83
                $region88: #{tpu_custom_call.1} parent=73 // loop_exit
                  _
              $region74: #{tpu_custom_call.1} parent=51 // pred_fallthru
                _
              // Predicated region
              $region89: #{tpu_custom_call.1} parent=51 // pred_check
                _
              $region90: #{tpu_custom_call.1} parent=51 // pred_check_branch
                %1391 = sbr.rel target = $region92
              $region91: #{tpu_custom_call.1} parent=51 // pred_region
                _
              $region92: #{tpu_custom_call.1} parent=51 // pred_fallthru
                _
            $region52: #{tpu_custom_call.1} parent=47 // pred_fallthru
              _
            // Predicated region
            $region53: #{tpu_custom_call.1} parent=47 // pred_check
              _
            $region54: #{tpu_custom_call.1} parent=47 // pred_check_branch
              %1046 = sbr.rel target = $region56
            $region55: #{tpu_custom_call.1} parent=47 // pred_region
              %s1048 = sshrl.u32 %s1033, 6
              // While loop
              $region57: #{tpu_custom_call.1} parent=55 // loop_pre_header
                _
              $region58: #{tpu_custom_call.1} parent=55 // loop_header
                %s1050 = sphi 0, %s1052
                %p1051 = scmp.ge.s32.totalorder %s1050, %s1048
                %s1055 = sphi 0, %s1188
                %s1056 = sphi %s1026, %s1191
                %s1057 = sphi %s1039, %s1192
              $region59: #{tpu_custom_call.1} parent=55 // loop_header_branch
                %1054 = sbr.rel (%p1051) target = $region63
              $region60: #{tpu_custom_call.1} parent=55 // loop_body
                %v1058 = vld [vmem:[%s1056] sm:$0xff]
                %1059 = vst [vmem:[%s1057] sm:$0xff] %v1058
                %v1060 = vld [vmem:[%s1056 + $0x8] sm:$0xff]
                %1061 = vst [vmem:[%s1057 + $0x8] sm:$0xff] %v1060
                %v1062 = vld [vmem:[%s1056 + $0x10] sm:$0xff]
                %1063 = vst [vmem:[%s1057 + $0x10] sm:$0xff] %v1062
                %v1064 = vld [vmem:[%s1056 + $0x18] sm:$0xff]
                %1065 = vst [vmem:[%s1057 + $0x18] sm:$0xff] %v1064
                %v1066 = vld [vmem:[%s1056 + $0x20] sm:$0xff]
                %1067 = vst [vmem:[%s1057 + $0x20] sm:$0xff] %v1066
                %v1068 = vld [vmem:[%s1056 + $0x28] sm:$0xff]
                %1069 = vst [vmem:[%s1057 + $0x28] sm:$0xff] %v1068
                %v1070 = vld [vmem:[%s1056 + $0x30] sm:$0xff]
                %1071 = vst [vmem:[%s1057 + $0x30] sm:$0xff] %v1070
                %v1072 = vld [vmem:[%s1056 + $0x38] sm:$0xff]
                %1073 = vst [vmem:[%s1057 + $0x38] sm:$0xff] %v1072
                %v1074 = vld [vmem:[%s1056 + $0x40] sm:$0xff]
                %1075 = vst [vmem:[%s1057 + $0x40] sm:$0xff] %v1074
                %v1076 = vld [vmem:[%s1056 + $0x48] sm:$0xff]
                %1077 = vst [vmem:[%s1057 + $0x48] sm:$0xff] %v1076
                %v1078 = vld [vmem:[%s1056 + $0x50] sm:$0xff]
                %1079 = vst [vmem:[%s1057 + $0x50] sm:$0xff] %v1078
                %v1080 = vld [vmem:[%s1056 + $0x58] sm:$0xff]
                %1081 = vst [vmem:[%s1057 + $0x58] sm:$0xff] %v1080
                %v1082 = vld [vmem:[%s1056 + $0x60] sm:$0xff]
                %1083 = vst [vmem:[%s1057 + $0x60] sm:$0xff] %v1082
                %v1084 = vld [vmem:[%s1056 + $0x68] sm:$0xff]
                %1085 = vst [vmem:[%s1057 + $0x68] sm:$0xff] %v1084
                %v1086 = vld [vmem:[%s1056 + $0x70] sm:$0xff]
                %1087 = vst [vmem:[%s1057 + $0x70] sm:$0xff] %v1086
                %v1088 = vld [vmem:[%s1056 + $0x78] sm:$0xff]
                %1089 = vst [vmem:[%s1057 + $0x78] sm:$0xff] %v1088
                %v1090 = vld [vmem:[%s1056 + $0x80] sm:$0xff]
                %1091 = vst [vmem:[%s1057 + $0x80] sm:$0xff] %v1090
                %v1092 = vld [vmem:[%s1056 + $0x88] sm:$0xff]
                %1093 = vst [vmem:[%s1057 + $0x88] sm:$0xff] %v1092
                %v1094 = vld [vmem:[%s1056 + $0x90] sm:$0xff]
                %1095 = vst [vmem:[%s1057 + $0x90] sm:$0xff] %v1094
                %v1096 = vld [vmem:[%s1056 + $0x98] sm:$0xff]
                %1097 = vst [vmem:[%s1057 + $0x98] sm:$0xff] %v1096
                %v1098 = vld [vmem:[%s1056 + $0xa0] sm:$0xff]
                %1099 = vst [vmem:[%s1057 + $0xa0] sm:$0xff] %v1098
                %v1100 = vld [vmem:[%s1056 + $0xa8] sm:$0xff]
                %1101 = vst [vmem:[%s1057 + $0xa8] sm:$0xff] %v1100
                %v1102 = vld [vmem:[%s1056 + $0xb0] sm:$0xff]
                %1103 = vst [vmem:[%s1057 + $0xb0] sm:$0xff] %v1102
                %v1104 = vld [vmem:[%s1056 + $0xb8] sm:$0xff]
                %1105 = vst [vmem:[%s1057 + $0xb8] sm:$0xff] %v1104
                %v1106 = vld [vmem:[%s1056 + $0xc0] sm:$0xff]
                %1107 = vst [vmem:[%s1057 + $0xc0] sm:$0xff] %v1106
                %v1108 = vld [vmem:[%s1056 + $0xc8] sm:$0xff]
                %1109 = vst [vmem:[%s1057 + $0xc8] sm:$0xff] %v1108
                %v1110 = vld [vmem:[%s1056 + $0xd0] sm:$0xff]
                %1111 = vst [vmem:[%s1057 + $0xd0] sm:$0xff] %v1110
                %v1112 = vld [vmem:[%s1056 + $0xd8] sm:$0xff]
                %1113 = vst [vmem:[%s1057 + $0xd8] sm:$0xff] %v1112
                %v1114 = vld [vmem:[%s1056 + $0xe0] sm:$0xff]
                %1115 = vst [vmem:[%s1057 + $0xe0] sm:$0xff] %v1114
                %v1116 = vld [vmem:[%s1056 + $0xe8] sm:$0xff]
                %1117 = vst [vmem:[%s1057 + $0xe8] sm:$0xff] %v1116
                %v1118 = vld [vmem:[%s1056 + $0xf0] sm:$0xff]
                %1119 = vst [vmem:[%s1057 + $0xf0] sm:$0xff] %v1118
                %v1120 = vld [vmem:[%s1056 + $0xf8] sm:$0xff]
                %1121 = vst [vmem:[%s1057 + $0xf8] sm:$0xff] %v1120
                %v1122 = vld [vmem:[%s1056 + $0x100] sm:$0xff]
                %1123 = vst [vmem:[%s1057 + $0x100] sm:$0xff] %v1122
                %v1124 = vld [vmem:[%s1056 + $0x108] sm:$0xff]
                %1125 = vst [vmem:[%s1057 + $0x108] sm:$0xff] %v1124
                %v1126 = vld [vmem:[%s1056 + $0x110] sm:$0xff]
                %1127 = vst [vmem:[%s1057 + $0x110] sm:$0xff] %v1126
                %v1128 = vld [vmem:[%s1056 + $0x118] sm:$0xff]
                %1129 = vst [vmem:[%s1057 + $0x118] sm:$0xff] %v1128
                %v1130 = vld [vmem:[%s1056 + $0x120] sm:$0xff]
                %1131 = vst [vmem:[%s1057 + $0x120] sm:$0xff] %v1130
                %v1132 = vld [vmem:[%s1056 + $0x128] sm:$0xff]
                %1133 = vst [vmem:[%s1057 + $0x128] sm:$0xff] %v1132
                %v1134 = vld [vmem:[%s1056 + $0x130] sm:$0xff]
                %1135 = vst [vmem:[%s1057 + $0x130] sm:$0xff] %v1134
                %v1136 = vld [vmem:[%s1056 + $0x138] sm:$0xff]
                %1137 = vst [vmem:[%s1057 + $0x138] sm:$0xff] %v1136
                %v1138 = vld [vmem:[%s1056 + $0x140] sm:$0xff]
                %1139 = vst [vmem:[%s1057 + $0x140] sm:$0xff] %v1138
                %v1140 = vld [vmem:[%s1056 + $0x148] sm:$0xff]
                %1141 = vst [vmem:[%s1057 + $0x148] sm:$0xff] %v1140
                %v1142 = vld [vmem:[%s1056 + $0x150] sm:$0xff]
                %1143 = vst [vmem:[%s1057 + $0x150] sm:$0xff] %v1142
                %v1144 = vld [vmem:[%s1056 + $0x158] sm:$0xff]
                %1145 = vst [vmem:[%s1057 + $0x158] sm:$0xff] %v1144
                %v1146 = vld [vmem:[%s1056 + $0x160] sm:$0xff]
                %1147 = vst [vmem:[%s1057 + $0x160] sm:$0xff] %v1146
                %v1148 = vld [vmem:[%s1056 + $0x168] sm:$0xff]
                %1149 = vst [vmem:[%s1057 + $0x168] sm:$0xff] %v1148
                %v1150 = vld [vmem:[%s1056 + $0x170] sm:$0xff]
                %1151 = vst [vmem:[%s1057 + $0x170] sm:$0xff] %v1150
                %v1152 = vld [vmem:[%s1056 + $0x178] sm:$0xff]
                %1153 = vst [vmem:[%s1057 + $0x178] sm:$0xff] %v1152
                %v1154 = vld [vmem:[%s1056 + $0x180] sm:$0xff]
                %1155 = vst [vmem:[%s1057 + $0x180] sm:$0xff] %v1154
                %v1156 = vld [vmem:[%s1056 + $0x188] sm:$0xff]
                %1157 = vst [vmem:[%s1057 + $0x188] sm:$0xff] %v1156
                %v1158 = vld [vmem:[%s1056 + $0x190] sm:$0xff]
                %1159 = vst [vmem:[%s1057 + $0x190] sm:$0xff] %v1158
                %v1160 = vld [vmem:[%s1056 + $0x198] sm:$0xff]
                %1161 = vst [vmem:[%s1057 + $0x198] sm:$0xff] %v1160
                %v1162 = vld [vmem:[%s1056 + $0x1a0] sm:$0xff]
                %1163 = vst [vmem:[%s1057 + $0x1a0] sm:$0xff] %v1162
                %v1164 = vld [vmem:[%s1056 + $0x1a8] sm:$0xff]
                %1165 = vst [vmem:[%s1057 + $0x1a8] sm:$0xff] %v1164
                %v1166 = vld [vmem:[%s1056 + $0x1b0] sm:$0xff]
                %1167 = vst [vmem:[%s1057 + $0x1b0] sm:$0xff] %v1166
                %v1168 = vld [vmem:[%s1056 + $0x1b8] sm:$0xff]
                %1169 = vst [vmem:[%s1057 + $0x1b8] sm:$0xff] %v1168
                %v1170 = vld [vmem:[%s1056 + $0x1c0] sm:$0xff]
                %1171 = vst [vmem:[%s1057 + $0x1c0] sm:$0xff] %v1170
                %v1172 = vld [vmem:[%s1056 + $0x1c8] sm:$0xff]
                %1173 = vst [vmem:[%s1057 + $0x1c8] sm:$0xff] %v1172
                %v1174 = vld [vmem:[%s1056 + $0x1d0] sm:$0xff]
                %1175 = vst [vmem:[%s1057 + $0x1d0] sm:$0xff] %v1174
                %v1176 = vld [vmem:[%s1056 + $0x1d8] sm:$0xff]
                %1177 = vst [vmem:[%s1057 + $0x1d8] sm:$0xff] %v1176
                %v1178 = vld [vmem:[%s1056 + $0x1e0] sm:$0xff]
                %1179 = vst [vmem:[%s1057 + $0x1e0] sm:$0xff] %v1178
                %v1180 = vld [vmem:[%s1056 + $0x1e8] sm:$0xff]
                %1181 = vst [vmem:[%s1057 + $0x1e8] sm:$0xff] %v1180
                %v1182 = vld [vmem:[%s1056 + $0x1f0] sm:$0xff]
                %1183 = vst [vmem:[%s1057 + $0x1f0] sm:$0xff] %v1182
                %v1184 = vld [vmem:[%s1056 + $0x1f8] sm:$0xff]
                %1185 = vst [vmem:[%s1057 + $0x1f8] sm:$0xff] %v1184
                %s1186 = sadd.s32 1, %s1055
                %p1187 = scmp.ge.s32.totalorder %s1186, %s1048
                %s1188 = scalar_select %p1187, 0, %s1186
                %s1189 = smul.u32 %s1188, 512
                %s1190 = smul.u32 %s1188, 512
                %s1191 = scalar_lea.vmem %s1026, %s1189 [#allocation6]
                %s1192 = scalar_lea.vmem %s1039, %s1190
              $region61: #{tpu_custom_call.1} parent=55 // loop_footer
                %s1052 = sadd.s32 %s1050, 1
              $region62: #{tpu_custom_call.1} parent=55 // loop_footer_branch
                %1049 = sbr.rel target = $region58
              $region63: #{tpu_custom_call.1} parent=55 // loop_exit
                _
              %s1193 = sshrl.u32 %s1033, 6
              %s1194 = sand.u32 %s1033, 63
              %s1195 = smul.u32 %s1193, 64
              %s1196 = smul.u32 8, %s1195
              %s1197 = scalar_lea.vmem %s1026, %s1196 [#allocation6]
              %s1198 = smul.u32 8, %s1195
              %s1199 = scalar_lea.vmem %s1039, %s1198
              // While loop
              $region64: #{tpu_custom_call.1} parent=55 // loop_pre_header
                _
              $region65: #{tpu_custom_call.1} parent=55 // loop_header
                %s1201 = sphi 0, %s1203
                %p1202 = scmp.ge.s32.totalorder %s1201, %s1194
                %s1206 = sphi 0, %s1213
                %s1207 = sphi %s1197, %s1216
                %s1208 = sphi %s1199, %s1217
              $region66: #{tpu_custom_call.1} parent=55 // loop_header_branch
                %1205 = sbr.rel (%p1202) target = $region70
              $region67: #{tpu_custom_call.1} parent=55 // loop_body
                %v1209 = vld [vmem:[%s1207] sm:$0xff]
                %1210 = vst [vmem:[%s1208] sm:$0xff] %v1209
                %s1211 = sadd.s32 1, %s1206
                %p1212 = scmp.ge.s32.totalorder %s1211, %s1194
                %s1213 = scalar_select %p1212, 0, %s1211
                %s1214 = smul.u32 %s1213, 8
                %s1215 = smul.u32 %s1213, 8
                %s1216 = scalar_lea.vmem %s1197, %s1214 [#allocation6]
                %s1217 = scalar_lea.vmem %s1199, %s1215
              $region68: #{tpu_custom_call.1} parent=55 // loop_footer
                %s1203 = sadd.s32 %s1201, 1
              $region69: #{tpu_custom_call.1} parent=55 // loop_footer_branch
                %1200 = sbr.rel target = $region65
              $region70: #{tpu_custom_call.1} parent=55 // loop_exit
                _
            $region56: #{tpu_custom_call.1} parent=47 // pred_fallthru
              _
          $region48: #{tpu_custom_call.1} parent=43 // pred_fallthru
            _
          %1392 = vnop
        $region44: #{tpu_custom_call.1} parent=31 // pred_fallthru
          _
      $region32: #{tpu_custom_call.1} parent=5 // pred_fallthru
        _
      %p1393 = scmp.le.s32.totalorder 2, %s13
      // Predicated region
      $region93: #{tpu_custom_call.1} parent=5 // pred_check
        %p1394 = pneg %p1393
      $region94: #{tpu_custom_call.1} parent=5 // pred_check_branch
        %1396 = sbr.rel (%p1394) target = $region96
      $region95: #{tpu_custom_call.1} parent=5 // pred_region
        %s1397 = ssub.s32 %s13, 2
        // Predicated region
        $region97: #{tpu_custom_call.1} parent=95 // pred_check
          %p1398 = pneg %p126
        $region98: #{tpu_custom_call.1} parent=95 // pred_check_branch
          %1400 = sbr.rel (%p1398) target = $region100
        $region99: #{tpu_custom_call.1} parent=95 // pred_region
          %s1401 = sand.u32 %s111, 1
          %s1402 = sand.u32 %s111, 1
          %s1403 = smul.addr %s1402, 512
          %s1404 = scalar_lea.vmem [#allocation6], %s1403
        $region100: #{tpu_custom_call.1} parent=95 // pred_fallthru
          _
      $region96: #{tpu_custom_call.1} parent=5 // pred_fallthru
        _
    $region6: #{tpu_custom_call.1} parent=1 // loop_footer
      %s17 = sadd.s32 1, %s13
    $region7: #{tpu_custom_call.1} parent=1 // loop_footer_branch
      %12 = sbr.rel target = $region3
    $region8: #{tpu_custom_call.1} parent=1 // loop_exit
      _
    %1405 = vsyncpa [#allocation3], 1
    %s1406 = scalar_lea.sflag [#allocation3], 1
    %1407 = vsyncpa %s1406, 1
    %1408 = vsyncpa [#allocation5], 1

</llo_original>
